<compile_context>
chip_gen: v6e
topology: v6e:2x2x1
jax: 0.10.0
libtpu: 0.0.40
codegen_flags: <defaults>
</compile_context>

<pallas_src>
import jax
import jax.numpy as jnp
from jax.experimental import pallas as pl
from jax.experimental.pallas import tpu as pltpu


def conv_bn_kernel(x_ref, w_ref, gb_ref, o_ref):
    # x_ref:  (C_in, M)        f32  (cast to bf16 in-kernel, on VMEM data)
    # w_ref:  (C_out_blk, C_in) bf16
    # gb_ref: (C_out_blk, 2)   f32  [:,0]=gamma, [:,1]=beta
    # o_ref:  (C_out_blk, M)   f32
    x = x_ref[...].astype(jnp.bfloat16)                       # in-kernel cast
    w = w_ref[...]

    # 1x1 conv == matmul on the MXU; bf16 inputs, f32 accumulation.
    y = jnp.dot(w, x, preferred_element_type=jnp.float32)     # (C_out_blk, M)

    m = y.shape[1]
    inv_m = jnp.float32(1.0 / m)

    # BatchNorm (training): batch stats over the pixel axis, biased variance,
    # centered second moment (avoids E[y^2]-E[y]^2 cancellation).
    mean = jnp.sum(y, axis=1, keepdims=True) * inv_m           # (C_out_blk, 1)
    yc = y - mean
    var = jnp.sum(yc * yc, axis=1, keepdims=True) * inv_m      # biased

    eps = jnp.float32(1e-5)
    inv_std = jax.lax.rsqrt(var + eps)
    gamma = gb_ref[:, 0:1]
    beta = gb_ref[:, 1:2]
    scale = gamma * inv_std                                    # (C_out_blk, 1)

    o_ref[...] = (yc * scale + beta).astype(o_ref.dtype)


def prepare_params(w_oi, gamma, beta):
    """One-time parameter prep (do NOT redo per forward call):
    bf16 conv weight + packed (C_out, 2) gamma/beta."""
    c_out = w_oi.shape[0]
    w_bf16 = w_oi.astype(jnp.bfloat16)                         # (C_out, C_in)
    gb = jnp.stack(
        [gamma.astype(jnp.float32), beta.astype(jnp.float32)], axis=1
    ).reshape(c_out, 2)
    return w_bf16, gb


def conv1x1_batchnorm(x_nchw, w_bf16, gb):
    """x_nchw: (N, C_in, H, W) f32; w_bf16: (C_out, C_in) bf16; gb: (C_out, 2) f32."""
    n, c_in, h, wd = x_nchw.shape
    c_out = w_bf16.shape[0]
    m = n * h * wd

    # Channel-major matrix. For N == 1 this is a pure reshape (no HBM
    # transpose). TODO(synk): for N > 1 keep a channel-major layout upstream
    # (or add N to the grid) to avoid this full-HBM transpose.
    if n == 1:
        x_cm = x_nchw.reshape(c_in, m)
    else:
        x_cm = jnp.transpose(x_nchw, (1, 0, 2, 3)).reshape(c_in, m)
    x_cm = x_cm.astype(jnp.float32)

    # Split C_out into 2 blocks (parallel grid axis -> both TCs on v7x; only
    # one extra cheap grid step on single-TC v5e/v6e). Stats are per output
    # channel, so no cross-block reduction is needed.
    if c_out % 2 == 0 and (c_out // 2) % 8 == 0:
        co_blk = c_out // 2
    else:
        co_blk = c_out
    n_blocks = c_out // co_blk

    cost = pl.CostEstimate(
        flops=2 * c_out * c_in * m,
        transcendentals=c_out,  # rsqrt per channel
        bytes_accessed=(c_in * m * 4) + (c_out * c_in * 2) + (c_out * 2 * 4)
        + (c_out * m * 4),
    )

    out_cm = pl.pallas_call(
        conv_bn_kernel,
        out_shape=jax.ShapeDtypeStruct((c_out, m), jnp.float32),
        grid_spec=pltpu.PrefetchScalarGridSpec(
            num_scalar_prefetch=0,
            grid=(n_blocks,),
            in_specs=[
                pl.BlockSpec((c_in, m), lambda i: (0, 0)),      # x resident
                pl.BlockSpec((co_blk, c_in), lambda i: (i, 0)),
                pl.BlockSpec((co_blk, 2), lambda i: (i, 0)),
            ],
            out_specs=pl.BlockSpec((co_blk, m), lambda i: (i, 0)),
        ),
        compiler_params=pltpu.CompilerParams(
            dimension_semantics=("parallel",),
        ),
        cost_estimate=cost,
    )(x_cm, w_bf16, gb)

    # (C_out, M) -> (N, C_out, H, W); pure reshape for N == 1.
    if n == 1:
        out = out_cm.reshape(1, c_out, h, wd)
    else:
        out = out_cm.reshape(c_out, n, h, wd).transpose(1, 0, 2, 3)
    return out


if __name__ == "__main__":
    key = jax.random.PRNGKey(0)
    k_x, k_w = jax.random.split(key)

    N, C_IN, H, W = 1, 1104, 14, 14
    C_OUT = 192

    # Deterministic synthetic inputs / parameters.
    x = jax.random.normal(k_x, (N, C_IN, H, W), dtype=jnp.float32)
    # Conv2d(1104, 192, 1x1, bias=False) weight -> (C_out, C_in).
    w = jax.random.normal(k_w, (C_OUT, C_IN), dtype=jnp.float32) * (1.0 / jnp.sqrt(C_IN))
    # BatchNorm2d affine init: gamma = 1, beta = 0.
    gamma = jnp.ones((C_OUT,), dtype=jnp.float32)
    beta = jnp.zeros((C_OUT,), dtype=jnp.float32)

    # One-time parameter prep (cached across steps in real use).
    w_bf16, gb = prepare_params(w, gamma, beta)

    out = conv1x1_batchnorm(x, w_bf16, gb)
    jax.block_until_ready(out)

    assert out.shape == (N, C_OUT, H, W), out.shape
    assert out.dtype == jnp.float32
    print("KERNEL_OK")
</pallas_src>

<mosaic_0001>
module attributes {stable_mosaic.version = 11 : i64} {
  func.func @conv_bn_kernel(%arg0: i32, %arg1: memref<1104x196xf32, #tpu.memory_space<vmem>>, %arg2: memref<96x1104xbf16, #tpu.memory_space<vmem>>, %arg3: memref<96x2xf32, #tpu.memory_space<vmem>>, %arg4: memref<96x196xf32, #tpu.memory_space<vmem>>) attributes {dimension_semantics = [#tpu.dimension_semantics<parallel>], iteration_bounds = array<i64: 2>, scalar_prefetch = 0 : i64, scratch_operands = 0 : i64, tpu.core_type = #tpu.core_type<tc>, window_params = [{pipeline_mode = #tpu.pipeline_mode<synchronous>, transform_indices = @transform_0, window_bounds = array<i64: 1104, 196>}, {transform_indices = @transform_1, window_bounds = array<i64: 96, 1104>}, {transform_indices = @transform_2, window_bounds = array<i64: 96, 2>}, {transform_indices = @transform_3, window_bounds = array<i64: 96, 196>}]} {
    %c0 = arith.constant 0 : index
    %c0_0 = arith.constant 0 : index
    %0 = vector.load %arg1[%c0, %c0_0] : memref<1104x196xf32, #tpu.memory_space<vmem>>, vector<1104x196xf32>
    %1 = arith.truncf %0 : vector<1104x196xf32> to vector<1104x196xbf16>
    %c0_1 = arith.constant 0 : index
    %c0_2 = arith.constant 0 : index
    %2 = vector.load %arg2[%c0_1, %c0_2] : memref<96x1104xbf16, #tpu.memory_space<vmem>>, vector<96x1104xbf16>
    %cst = arith.constant dense<0.000000e+00> : vector<96x196xf32>
    %3 = tpu.matmul %2, %1, %cst {dimension_numbers = #tpu.dot_dimension_numbers<[1], [0], [0], [1], [0, 0, 1, 1], [], []>} : vector<96x1104xbf16>, vector<1104x196xbf16>, vector<96x196xf32> -> vector<96x196xf32>
    %cst_3 = arith.constant dense<0.000000e+00> : vector<96xf32>
    %4 = vector.multi_reduction <add>, %3, %cst_3 [1] : vector<96x196xf32> to vector<96xf32>
    %5 = vector.shape_cast %4 : vector<96xf32> to vector<96x1xf32>
    %cst_4 = arith.constant 0.00510204071 : f32
    %6 = vector.broadcast %cst_4 : f32 to vector<96x1xf32>
    %7 = arith.mulf %5, %6 : vector<96x1xf32>
    %8 = vector.broadcast %7 : vector<96x1xf32> to vector<96x196xf32>
    %9 = arith.subf %3, %8 : vector<96x196xf32>
    %10 = arith.mulf %9, %9 : vector<96x196xf32>
    %cst_5 = arith.constant dense<0.000000e+00> : vector<96xf32>
    %11 = vector.multi_reduction <add>, %10, %cst_5 [1] : vector<96x196xf32> to vector<96xf32>
    %12 = vector.shape_cast %11 : vector<96xf32> to vector<96x1xf32>
    %cst_6 = arith.constant 0.00510204071 : f32
    %13 = vector.broadcast %cst_6 : f32 to vector<96x1xf32>
    %14 = arith.mulf %12, %13 : vector<96x1xf32>
    %cst_7 = arith.constant 9.99999974E-6 : f32
    %15 = vector.broadcast %cst_7 : f32 to vector<96x1xf32>
    %16 = arith.addf %14, %15 : vector<96x1xf32>
    %17 = math.rsqrt %16 : vector<96x1xf32>
    %c0_8 = arith.constant 0 : index
    %c0_9 = arith.constant 0 : index
    %18 = vector.load %arg3[%c0_8, %c0_9] : memref<96x2xf32, #tpu.memory_space<vmem>>, vector<96x1xf32>
    %c0_10 = arith.constant 0 : index
    %c1 = arith.constant 1 : index
    %19 = vector.load %arg3[%c0_10, %c1] : memref<96x2xf32, #tpu.memory_space<vmem>>, vector<96x1xf32>
    %20 = arith.mulf %18, %17 : vector<96x1xf32>
    %21 = vector.broadcast %20 : vector<96x1xf32> to vector<96x196xf32>
    %22 = arith.mulf %9, %21 : vector<96x196xf32>
    %23 = vector.broadcast %19 : vector<96x1xf32> to vector<96x196xf32>
    %24 = arith.addf %22, %23 : vector<96x196xf32>
    %c0_11 = arith.constant 0 : index
    %c0_12 = arith.constant 0 : index
    %25 = vector.load %arg4[%c0_11, %c0_12] : memref<96x196xf32, #tpu.memory_space<vmem>>, vector<96x196xf32>
    tpu.vector_store %arg4[%c0_11, %c0_12], %24 {strides = array<i32>} : memref<96x196xf32, #tpu.memory_space<vmem>>, vector<96x196xf32>,
    return
  }
  func.func @transform_0(%arg0: i32) -> (i32, i32) {
    %c0_i32 = arith.constant 0 : i32
    %c0_i32_0 = arith.constant 0 : i32
    %c0_i32_1 = arith.constant 0 : i32
    return %c0_i32, %c0_i32_0 : i32, i32
  }
  func.func @transform_1(%arg0: i32) -> (i32, i32) {
    %c0_i32 = arith.constant 0 : i32
    %c0_i32_0 = arith.constant 0 : i32
    return %arg0, %c0_i32 : i32, i32
  }
  func.func @transform_2(%arg0: i32) -> (i32, i32) {
    %c0_i32 = arith.constant 0 : i32
    %c0_i32_0 = arith.constant 0 : i32
    return %arg0, %c0_i32 : i32, i32
  }
  func.func @transform_3(%arg0: i32) -> (i32, i32) {
    %c0_i32 = arith.constant 0 : i32
    %c0_i32_0 = arith.constant 0 : i32
    return %arg0, %c0_i32 : i32, i32
  }
}

</mosaic_0001>

<llo_original>
// kernel: tpu_custom_call.1
$region0: #{tpu_custom_call.1}
  #allocation0 [shape = 'u32[]', space=smem, size = 0x4, offset = 0x4, fixed_abs, tag = 'smem constant byte address 0x4 - core index']
  #allocation1 [shape = 'u32[144,128]{1,0:T(1,128)}', space=vmem, size = 0x12000, scoped, tag = 'internal scratch']
  %s0 = inlined_call_operand.vmem [shape: f32[1104,196], index: 0, kind: input, shape index: {}]
  %s1 = inlined_call_operand.vmem [shape: bf16[192,1104], index: 1, kind: input, shape index: {}]
  %s2 = inlined_call_operand.vmem [shape: f32[192,2], index: 2, kind: input, shape index: {}]
  %s3 = inlined_call_operand.hbm [shape: f32[192,196], index: 3, kind: output, shape index: {}]
  %s4 = sld [smem:[#allocation0]]
  $region45: #{tpu_custom_call.1} parent=0
    _
  %s6 = ssub.s32 1, %s4
  %s7 = scalar_select 0, %s6, %s4
  $region1: #{tpu_custom_call.1} parent=0
    #allocation2 [shape = 'u8[196608]{0}', space=vmem, size = 0x30000, scoped, tag = 'output window, operand 0']
    #allocation3 [shape = 's32[2]{0}', space=sflag, size = 0x8, scoped, tag = 'scoped memory for tpu_custom_call.1']
    %8 = vsyncpa [#allocation3], 0
    %s9 = scalar_lea.sflag [#allocation3], 1
    %10 = vsyncpa %s9, 0
    loop: start=0, step=1, limit=4
    $region2: #{tpu_custom_call.1} parent=1 // loop_pre_header
      _
    $region3: #{tpu_custom_call.1} parent=1 // loop_header
      %s12 = sphi 0, %s16
      %p13 = scmp.ge.s32.totalorder %s12, 4
      %s20 = sphi 0, %s20
      %s22 = sphi 0, %s20
      %s23 = sphi 0, %s22
      %s37 = sphi 0, %s23
      %s43 = sphi 0, %s45
      %s46 = sphi 0, %s43
      %s47 = sphi 0, %s46
      %s63 = sphi 0, %s47
      %s69 = sphi 0, %s71
      %s72 = sphi 0, %s69
      %s73 = sphi 0, %s72
      %s89 = sphi 0, %s73
      %s95 = sphi 0, %s97
      %s98 = sphi 0, %s95
      %s99 = sphi 0, %s98
      %s115 = sphi 0, %s99
    $region4: #{tpu_custom_call.1} parent=1 // loop_header_branch
      %15 = sbr.rel (%p13) target = $region8
    $region5: #{tpu_custom_call.1} parent=1 // loop_body
      %s17 = ssub.s32 %s12, 1
      %s18 = ssub.s32 %s12, 2
      %s19 = sadd.s32 %s12, 1
      %s21 = sadd.s32 %s20, 1
      %p24 = scmp.eq.s32.totalorder %s12, 1
      %p25 = scmp.ne.s32.totalorder %s20, %s22
      %p26 = scmp.eq.s32.totalorder %s12, 0
      %p27 = por %p25, %p26
      %p28 = scmp.ne.s32.totalorder %s20, %s22
      %p29 = scmp.eq.s32.totalorder %s17, 1
      %p30 = por %p28, %p29
      %p31 = scmp.ne.s32.totalorder %s22, %s23
      %p32 = scmp.eq.s32.totalorder %s17, 0
      %p33 = por %p31, %p32
      %p34 = scmp.ne.s32.totalorder %s22, %s23
      %p35 = scmp.eq.s32.totalorder %s18, 1
      %p36 = por %p34, %p35
      %p38 = scmp.ne.s32.totalorder %s23, %s37
      %p39 = scmp.eq.s32.totalorder %s18, 0
      %p40 = por %p38, %p39
      %s41 = ssub.s32 %s12, %s19
      %p42 = scmp.eq.s32.totalorder %s41, 0
      %s44 = sadd.s32 %s43, 1
      %s45 = scalar_select %p42, %s43, %s44
      %p48 = pneg %p42
      %p49 = scmp.eq.s32.totalorder %s12, 1
      %p50 = por %p48, %p49
      %p51 = scmp.ne.s32.totalorder %s43, %s46
      %p52 = scmp.eq.s32.totalorder %s12, 0
      %p53 = por %p51, %p52
      %p54 = scmp.ne.s32.totalorder %s43, %s46
      %p55 = scmp.eq.s32.totalorder %s17, 1
      %p56 = por %p54, %p55
      %p57 = scmp.ne.s32.totalorder %s46, %s47
      %p58 = scmp.eq.s32.totalorder %s17, 0
      %p59 = por %p57, %p58
      %p60 = scmp.ne.s32.totalorder %s46, %s47
      %p61 = scmp.eq.s32.totalorder %s18, 1
      %p62 = por %p60, %p61
      %p64 = scmp.ne.s32.totalorder %s47, %s63
      %p65 = scmp.eq.s32.totalorder %s18, 0
      %p66 = por %p64, %p65
      %s67 = ssub.s32 %s12, %s19
      %p68 = scmp.eq.s32.totalorder %s67, 0
      %s70 = sadd.s32 %s69, 1
      %s71 = scalar_select %p68, %s69, %s70
      %p74 = pneg %p68
      %p75 = scmp.eq.s32.totalorder %s12, 1
      %p76 = por %p74, %p75
      %p77 = scmp.ne.s32.totalorder %s69, %s72
      %p78 = scmp.eq.s32.totalorder %s12, 0
      %p79 = por %p77, %p78
      %p80 = scmp.ne.s32.totalorder %s69, %s72
      %p81 = scmp.eq.s32.totalorder %s17, 1
      %p82 = por %p80, %p81
      %p83 = scmp.ne.s32.totalorder %s72, %s73
      %p84 = scmp.eq.s32.totalorder %s17, 0
      %p85 = por %p83, %p84
      %p86 = scmp.ne.s32.totalorder %s72, %s73
      %p87 = scmp.eq.s32.totalorder %s18, 1
      %p88 = por %p86, %p87
      %p90 = scmp.ne.s32.totalorder %s73, %s89
      %p91 = scmp.eq.s32.totalorder %s18, 0
      %p92 = por %p90, %p91
      %s93 = ssub.s32 %s12, %s19
      %p94 = scmp.eq.s32.totalorder %s93, 0
      %s96 = sadd.s32 %s95, 1
      %s97 = scalar_select %p94, %s95, %s96
      %p100 = pneg %p94
      %p101 = scmp.eq.s32.totalorder %s12, 1
      %p102 = por %p100, %p101
      %p103 = scmp.ne.s32.totalorder %s95, %s98
      %p104 = scmp.eq.s32.totalorder %s12, 0
      %p105 = por %p103, %p104
      %p106 = scmp.ne.s32.totalorder %s95, %s98
      %p107 = scmp.eq.s32.totalorder %s17, 1
      %p108 = por %p106, %p107
      %p109 = scmp.ne.s32.totalorder %s98, %s99
      %p110 = scmp.eq.s32.totalorder %s17, 0
      %p111 = por %p109, %p110
      %p112 = scmp.ne.s32.totalorder %s98, %s99
      %p113 = scmp.eq.s32.totalorder %s18, 1
      %p114 = por %p112, %p113
      %p116 = scmp.ne.s32.totalorder %s99, %s115
      %p117 = scmp.eq.s32.totalorder %s18, 0
      %p118 = por %p116, %p117
      %p119 = scmp.le.s32.totalorder 1, %s12
      %p120 = scmp.lt.s32.totalorder %s12, 3
      %p121 = pnand %p119, %p120
      %p122 = pneg %p121
      // Predicated region
      $region9: #{tpu_custom_call.1} parent=5 // pred_check
        _
      $region10: #{tpu_custom_call.1} parent=5 // pred_check_branch
        %124 = sbr.rel (%p121) target = $region12
      $region11: #{tpu_custom_call.1} parent=5 // pred_region
        %s125 = ssub.s32 %s12, 1
        // Predicated region
        $region13: #{tpu_custom_call.1} parent=11 // pred_check
          %p126 = pneg %p33
        $region14: #{tpu_custom_call.1} parent=11 // pred_check_branch
          %128 = sbr.rel (%p126) target = $region16
        $region15: #{tpu_custom_call.1} parent=11 // pred_region
          _
        $region16: #{tpu_custom_call.1} parent=11 // pred_fallthru
          _
      $region12: #{tpu_custom_call.1} parent=5 // pred_fallthru
        _
      %p129 = scmp.lt.s32.totalorder %s12, 2
      // Predicated region
      $region17: #{tpu_custom_call.1} parent=5 // pred_check
        %p130 = pneg %p129
      $region18: #{tpu_custom_call.1} parent=5 // pred_check_branch
        %132 = sbr.rel (%p130) target = $region20
      $region19: #{tpu_custom_call.1} parent=5 // pred_region
        // Predicated region
        $region21: #{tpu_custom_call.1} parent=19 // pred_check
          %p133 = pneg %p53
        $region22: #{tpu_custom_call.1} parent=19 // pred_check_branch
          %135 = sbr.rel (%p133) target = $region24
        $region23: #{tpu_custom_call.1} parent=19 // pred_region
          %s136 = smul.u32 12, %s12
          %p137 = scmp.lt.s32.totalorder %s136, 23
          %s138 = scalar_select %p137, %s136, 23
          %s139 = smul.addr %s138, 9
          %s140 = smul.addr %s139, 4
          %s141 = scalar_lea.vmem %s1, %s140
          %s142 = smul.u32 12, %s12
        $region24: #{tpu_custom_call.1} parent=19 // pred_fallthru
          _
        // Predicated region
        $region25: #{tpu_custom_call.1} parent=19 // pred_check
          %p143 = pneg %p79
        $region26: #{tpu_custom_call.1} parent=19 // pred_check_branch
          %145 = sbr.rel (%p143) target = $region28
        $region27: #{tpu_custom_call.1} parent=19 // pred_region
          %s146 = smul.u32 12, %s12
          %p147 = scmp.lt.s32.totalorder %s146, 23
          %s148 = scalar_select %p147, %s146, 23
          %s149 = smul.addr %s148, 8
          %s150 = scalar_lea.vmem %s2, %s149
          %s151 = smul.u32 12, %s12
        $region28: #{tpu_custom_call.1} parent=19 // pred_fallthru
          _
      $region20: #{tpu_custom_call.1} parent=5 // pred_fallthru
        _
      %p152 = scmp.le.s32.totalorder 1, %s12
      %p153 = scmp.lt.s32.totalorder %s12, 3
      %p154 = pnand %p152, %p153
      %p155 = pneg %p154
      // Predicated region
      $region29: #{tpu_custom_call.1} parent=5 // pred_check
        _
      $region30: #{tpu_custom_call.1} parent=5 // pred_check_branch
        %157 = sbr.rel (%p154) target = $region32
      $region31: #{tpu_custom_call.1} parent=5 // pred_region
        %s158 = ssub.s32 %s12, 1
        %p159 = pneg %p33
        %p160 = pneg %p30
        %s161 = smul.u32 12, %s17
        %p162 = scmp.lt.s32.totalorder %s161, 23
        %s163 = scalar_select %p162, %s161, 23
        %s164 = smul.addr %s163, 9
        %s165 = smul.addr %s164, 4
        %s166 = scalar_lea.vmem %s1, %s165
        %p167 = pneg %p59
        %p168 = pneg %p56
        %s169 = smul.u32 12, %s17
        %p170 = scmp.lt.s32.totalorder %s169, 23
        %s171 = scalar_select %p170, %s169, 23
        %s172 = smul.addr %s171, 8
        %s173 = scalar_lea.vmem %s2, %s172
        %p174 = pneg %p85
        %p175 = pneg %p82
        %p176 = pneg %p111
        %p177 = pneg %p108
        %s178 = sand.u32 %s98, 1
        %s179 = scalar_lea.sflag [#allocation3], %s178
        %s180 = sand.u32 %s98, 1
        %s181 = smul.addr %s180, 192
        %s182 = scalar_lea.vmem [#allocation2], %s181
        %s183 = smul.u32 12, %s17
        %p184 = scmp.lt.s32.totalorder %s183, 23
        %s185 = scalar_select %p184, %s183, 23
        %s186 = smul.addr %s185, 9
        %s187 = smul.addr %s186, 4
        %s188 = scalar_lea.vmem %s1, %s187
        %s189 = smul.u32 12, %s17
        %s190 = smul.u32 12, %s17
        %p191 = scmp.lt.s32.totalorder %s190, 23
        %s192 = scalar_select %p191, %s190, 23
        %s193 = smul.addr %s192, 8
        %s194 = scalar_lea.vmem %s2, %s193
        %s195 = smul.u32 12, %s17
        %s196 = smul.u32 12, %s17
        %v198 = vld [vmem:[%s0] sm:$0xff]
        %v199 = vld [vmem:[%s0 + $0x8] sm:$0xff]
        %v200 = vld [vmem:[%s0 + $0x10] sm:$0xff]
        %v201 = vld [vmem:[%s0 + $0x18] sm:$0xff]
        %v202 = vld [vmem:[%s0 + $0x20] sm:$0xff]
        %v203 = vld [vmem:[%s0 + $0x28] sm:$0xff]
        %v204 = vld [vmem:[%s0 + $0x30] sm:$0xff]
        %v205 = vld [vmem:[%s0 + $0x38] sm:$0xff]
        %v206 = vld [vmem:[%s0 + $0x40] sm:$0xff]
        %v207 = vld [vmem:[%s0 + $0x48] sm:$0xff]
        %v208 = vld [vmem:[%s0 + $0x50] sm:$0xff]
        %v209 = vld [vmem:[%s0 + $0x58] sm:$0xff]
        %v210 = vld [vmem:[%s0 + $0x60] sm:$0xff]
        %v211 = vld [vmem:[%s0 + $0x68] sm:$0xff]
        %v212 = vld [vmem:[%s0 + $0x70] sm:$0xff]
        %v213 = vld [vmem:[%s0 + $0x78] sm:$0xff]
        %v214 = vld [vmem:[%s0 + $0x80] sm:$0xff]
        %v215 = vld [vmem:[%s0 + $0x88] sm:$0xff]
        %v216 = vld [vmem:[%s0 + $0x90] sm:$0xff]
        %v217 = vld [vmem:[%s0 + $0x98] sm:$0xff]
        %v218 = vld [vmem:[%s0 + $0xa0] sm:$0xff]
        %v219 = vld [vmem:[%s0 + $0xa8] sm:$0xff]
        %v220 = vld [vmem:[%s0 + $0xb0] sm:$0xff]
        %v221 = vld [vmem:[%s0 + $0xb8] sm:$0xff]
        %v222 = vld [vmem:[%s0 + $0xc0] sm:$0xff]
        %v223 = vld [vmem:[%s0 + $0xc8] sm:$0xff]
        %v224 = vld [vmem:[%s0 + $0xd0] sm:$0xff]
        %v225 = vld [vmem:[%s0 + $0xd8] sm:$0xff]
        %v226 = vld [vmem:[%s0 + $0xe0] sm:$0xff]
        %v227 = vld [vmem:[%s0 + $0xe8] sm:$0xff]
        %v228 = vld [vmem:[%s0 + $0xf0] sm:$0xff]
        %v229 = vld [vmem:[%s0 + $0xf8] sm:$0xff]
        %v230 = vld [vmem:[%s0 + $0x100] sm:$0xff]
        %v231 = vld [vmem:[%s0 + $0x108] sm:$0xff]
        %v232 = vld [vmem:[%s0 + $0x110] sm:$0xff]
        %v233 = vld [vmem:[%s0 + $0x118] sm:$0xff]
        %v234 = vld [vmem:[%s0 + $0x120] sm:$0xff]
        %v235 = vld [vmem:[%s0 + $0x128] sm:$0xff]
        %v236 = vld [vmem:[%s0 + $0x130] sm:$0xff]
        %v237 = vld [vmem:[%s0 + $0x138] sm:$0xff]
        %v238 = vld [vmem:[%s0 + $0x140] sm:$0xff]
        %v239 = vld [vmem:[%s0 + $0x148] sm:$0xff]
        %v240 = vld [vmem:[%s0 + $0x150] sm:$0xff]
        %v241 = vld [vmem:[%s0 + $0x158] sm:$0xff]
        %v242 = vld [vmem:[%s0 + $0x160] sm:$0xff]
        %v243 = vld [vmem:[%s0 + $0x168] sm:$0xff]
        %v244 = vld [vmem:[%s0 + $0x170] sm:$0xff]
        %v245 = vld [vmem:[%s0 + $0x178] sm:$0xff]
        %v246 = vld [vmem:[%s0 + $0x180] sm:$0xff]
        %v247 = vld [vmem:[%s0 + $0x188] sm:$0xff]
        %v248 = vld [vmem:[%s0 + $0x190] sm:$0xff]
        %v249 = vld [vmem:[%s0 + $0x198] sm:$0xff]
        %v250 = vld [vmem:[%s0 + $0x1a0] sm:$0xff]
        %v251 = vld [vmem:[%s0 + $0x1a8] sm:$0xff]
        %v252 = vld [vmem:[%s0 + $0x1b0] sm:$0xff]
        %v253 = vld [vmem:[%s0 + $0x1b8] sm:$0xff]
        %v254 = vld [vmem:[%s0 + $0x1c0] sm:$0xff]
        %v255 = vld [vmem:[%s0 + $0x1c8] sm:$0xff]
        %v256 = vld [vmem:[%s0 + $0x1d0] sm:$0xff]
        %v257 = vld [vmem:[%s0 + $0x1d8] sm:$0xff]
        %v258 = vld [vmem:[%s0 + $0x1e0] sm:$0xff]
        %v259 = vld [vmem:[%s0 + $0x1e8] sm:$0xff]
        %v260 = vld [vmem:[%s0 + $0x1f0] sm:$0xff]
        %v261 = vld [vmem:[%s0 + $0x1f8] sm:$0xff]
        %v262 = vld [vmem:[%s0 + $0x200] sm:$0xff]
        %v263 = vld [vmem:[%s0 + $0x208] sm:$0xff]
        %v264 = vld [vmem:[%s0 + $0x210] sm:$0xff]
        %v265 = vld [vmem:[%s0 + $0x218] sm:$0xff]
        %v266 = vld [vmem:[%s0 + $0x220] sm:$0xff]
        %v267 = vld [vmem:[%s0 + $0x228] sm:$0xff]
        %v268 = vld [vmem:[%s0 + $0x230] sm:$0xff]
        %v269 = vld [vmem:[%s0 + $0x238] sm:$0xff]
        %v270 = vld [vmem:[%s0 + $0x240] sm:$0xff]
        %v271 = vld [vmem:[%s0 + $0x248] sm:$0xff]
        %v272 = vld [vmem:[%s0 + $0x250] sm:$0xff]
        %v273 = vld [vmem:[%s0 + $0x258] sm:$0xff]
        %v274 = vld [vmem:[%s0 + $0x260] sm:$0xff]
        %v275 = vld [vmem:[%s0 + $0x268] sm:$0xff]
        %v276 = vld [vmem:[%s0 + $0x270] sm:$0xff]
        %v277 = vld [vmem:[%s0 + $0x278] sm:$0xff]
        %v278 = vld [vmem:[%s0 + $0x280] sm:$0xff]
        %v279 = vld [vmem:[%s0 + $0x288] sm:$0xff]
        %v280 = vld [vmem:[%s0 + $0x290] sm:$0xff]
        %v281 = vld [vmem:[%s0 + $0x298] sm:$0xff]
        %v282 = vld [vmem:[%s0 + $0x2a0] sm:$0xff]
        %v283 = vld [vmem:[%s0 + $0x2a8] sm:$0xff]
        %v284 = vld [vmem:[%s0 + $0x2b0] sm:$0xff]
        %v285 = vld [vmem:[%s0 + $0x2b8] sm:$0xff]
        %v286 = vld [vmem:[%s0 + $0x2c0] sm:$0xff]
        %v287 = vld [vmem:[%s0 + $0x2c8] sm:$0xff]
        %v288 = vld [vmem:[%s0 + $0x2d0] sm:$0xff]
        %v289 = vld [vmem:[%s0 + $0x2d8] sm:$0xff]
        %v290 = vld [vmem:[%s0 + $0x2e0] sm:$0xff]
        %v291 = vld [vmem:[%s0 + $0x2e8] sm:$0xff]
        %v292 = vld [vmem:[%s0 + $0x2f0] sm:$0xff]
        %v293 = vld [vmem:[%s0 + $0x2f8] sm:$0xff]
        %v294 = vld [vmem:[%s0 + $0x300] sm:$0xff]
        %v295 = vld [vmem:[%s0 + $0x308] sm:$0xff]
        %v296 = vld [vmem:[%s0 + $0x310] sm:$0xff]
        %v297 = vld [vmem:[%s0 + $0x318] sm:$0xff]
        %v298 = vld [vmem:[%s0 + $0x320] sm:$0xff]
        %v299 = vld [vmem:[%s0 + $0x328] sm:$0xff]
        %v300 = vld [vmem:[%s0 + $0x330] sm:$0xff]
        %v301 = vld [vmem:[%s0 + $0x338] sm:$0xff]
        %v302 = vld [vmem:[%s0 + $0x340] sm:$0xff]
        %v303 = vld [vmem:[%s0 + $0x348] sm:$0xff]
        %v304 = vld [vmem:[%s0 + $0x350] sm:$0xff]
        %v305 = vld [vmem:[%s0 + $0x358] sm:$0xff]
        %v306 = vld [vmem:[%s0 + $0x360] sm:$0xff]
        %v307 = vld [vmem:[%s0 + $0x368] sm:$0xff]
        %v308 = vld [vmem:[%s0 + $0x370] sm:$0xff]
        %v309 = vld [vmem:[%s0 + $0x378] sm:$0xff]
        %v310 = vld [vmem:[%s0 + $0x380] sm:$0xff]
        %v311 = vld [vmem:[%s0 + $0x388] sm:$0xff]
        %v312 = vld [vmem:[%s0 + $0x390] sm:$0xff]
        %v313 = vld [vmem:[%s0 + $0x398] sm:$0xff]
        %v314 = vld [vmem:[%s0 + $0x3a0] sm:$0xff]
        %v315 = vld [vmem:[%s0 + $0x3a8] sm:$0xff]
        %v316 = vld [vmem:[%s0 + $0x3b0] sm:$0xff]
        %v317 = vld [vmem:[%s0 + $0x3b8] sm:$0xff]
        %v318 = vld [vmem:[%s0 + $0x3c0] sm:$0xff]
        %v319 = vld [vmem:[%s0 + $0x3c8] sm:$0xff]
        %v320 = vld [vmem:[%s0 + $0x3d0] sm:$0xff]
        %v321 = vld [vmem:[%s0 + $0x3d8] sm:$0xff]
        %v322 = vld [vmem:[%s0 + $0x3e0] sm:$0xff]
        %v323 = vld [vmem:[%s0 + $0x3e8] sm:$0xff]
        %v324 = vld [vmem:[%s0 + $0x3f0] sm:$0xff]
        %v325 = vld [vmem:[%s0 + $0x3f8] sm:$0xff]
        %v326 = vld [vmem:[%s0 + $0x400] sm:$0xff]
        %v327 = vld [vmem:[%s0 + $0x408] sm:$0xff]
        %v328 = vld [vmem:[%s0 + $0x410] sm:$0xff]
        %v329 = vld [vmem:[%s0 + $0x418] sm:$0xff]
        %v330 = vld [vmem:[%s0 + $0x420] sm:$0xff]
        %v331 = vld [vmem:[%s0 + $0x428] sm:$0xff]
        %v332 = vld [vmem:[%s0 + $0x430] sm:$0xff]
        %v333 = vld [vmem:[%s0 + $0x438] sm:$0xff]
        %v334 = vld [vmem:[%s0 + $0x440] sm:$0xff]
        %v335 = vld [vmem:[%s0 + $0x448] sm:$0xff]
        %v336 = vld [vmem:[%s0 + $0x450] sm:$0xff]
        %v337 = vld [vmem:[%s0 + $0x458] sm:$0xff]
        %v338 = vld [vmem:[%s0 + $0x460] sm:$0xff]
        %v339 = vld [vmem:[%s0 + $0x468] sm:$0xff]
        %v340 = vld [vmem:[%s0 + $0x470] sm:$0xff]
        %v341 = vld [vmem:[%s0 + $0x478] sm:$0xff]
        %v342 = vld [vmem:[%s0 + $0x480] sm:$0xff]
        %v343 = vld [vmem:[%s0 + $0x488] sm:$0xff]
        %v344 = vld [vmem:[%s0 + $0x490] sm:$0xff]
        %v345 = vld [vmem:[%s0 + $0x498] sm:$0xff]
        %v346 = vld [vmem:[%s0 + $0x4a0] sm:$0xff]
        %v347 = vld [vmem:[%s0 + $0x4a8] sm:$0xff]
        %v348 = vld [vmem:[%s0 + $0x4b0] sm:$0xff]
        %v349 = vld [vmem:[%s0 + $0x4b8] sm:$0xff]
        %v350 = vld [vmem:[%s0 + $0x4c0] sm:$0xff]
        %v351 = vld [vmem:[%s0 + $0x4c8] sm:$0xff]
        %v352 = vld [vmem:[%s0 + $0x4d0] sm:$0xff]
        %v353 = vld [vmem:[%s0 + $0x4d8] sm:$0xff]
        %v354 = vld [vmem:[%s0 + $0x4e0] sm:$0xff]
        %v355 = vld [vmem:[%s0 + $0x4e8] sm:$0xff]
        %v356 = vld [vmem:[%s0 + $0x4f0] sm:$0xff]
        %v357 = vld [vmem:[%s0 + $0x4f8] sm:$0xff]
        %v358 = vld [vmem:[%s0 + $0x500] sm:$0xff]
        %v359 = vld [vmem:[%s0 + $0x508] sm:$0xff]
        %v360 = vld [vmem:[%s0 + $0x510] sm:$0xff]
        %v361 = vld [vmem:[%s0 + $0x518] sm:$0xff]
        %v362 = vld [vmem:[%s0 + $0x520] sm:$0xff]
        %v363 = vld [vmem:[%s0 + $0x528] sm:$0xff]
        %v364 = vld [vmem:[%s0 + $0x530] sm:$0xff]
        %v365 = vld [vmem:[%s0 + $0x538] sm:$0xff]
        %v366 = vld [vmem:[%s0 + $0x540] sm:$0xff]
        %v367 = vld [vmem:[%s0 + $0x548] sm:$0xff]
        %v368 = vld [vmem:[%s0 + $0x550] sm:$0xff]
        %v369 = vld [vmem:[%s0 + $0x558] sm:$0xff]
        %v370 = vld [vmem:[%s0 + $0x560] sm:$0xff]
        %v371 = vld [vmem:[%s0 + $0x568] sm:$0xff]
        %v372 = vld [vmem:[%s0 + $0x570] sm:$0xff]
        %v373 = vld [vmem:[%s0 + $0x578] sm:$0xff]
        %v374 = vld [vmem:[%s0 + $0x580] sm:$0xff]
        %v375 = vld [vmem:[%s0 + $0x588] sm:$0xff]
        %v376 = vld [vmem:[%s0 + $0x590] sm:$0xff]
        %v377 = vld [vmem:[%s0 + $0x598] sm:$0xff]
        %v378 = vld [vmem:[%s0 + $0x5a0] sm:$0xff]
        %v379 = vld [vmem:[%s0 + $0x5a8] sm:$0xff]
        %v380 = vld [vmem:[%s0 + $0x5b0] sm:$0xff]
        %v381 = vld [vmem:[%s0 + $0x5b8] sm:$0xff]
        %v382 = vld [vmem:[%s0 + $0x5c0] sm:$0xff]
        %v383 = vld [vmem:[%s0 + $0x5c8] sm:$0xff]
        %v384 = vld [vmem:[%s0 + $0x5d0] sm:$0xff]
        %v385 = vld [vmem:[%s0 + $0x5d8] sm:$0xff]
        %v386 = vld [vmem:[%s0 + $0x5e0] sm:$0xff]
        %v387 = vld [vmem:[%s0 + $0x5e8] sm:$0xff]
        %v388 = vld [vmem:[%s0 + $0x5f0] sm:$0xff]
        %v389 = vld [vmem:[%s0 + $0x5f8] sm:$0xff]
        %v390 = vld [vmem:[%s0 + $0x600] sm:$0xff]
        %v391 = vld [vmem:[%s0 + $0x608] sm:$0xff]
        %v392 = vld [vmem:[%s0 + $0x610] sm:$0xff]
        %v393 = vld [vmem:[%s0 + $0x618] sm:$0xff]
        %v394 = vld [vmem:[%s0 + $0x620] sm:$0xff]
        %v395 = vld [vmem:[%s0 + $0x628] sm:$0xff]
        %v396 = vld [vmem:[%s0 + $0x630] sm:$0xff]
        %v397 = vld [vmem:[%s0 + $0x638] sm:$0xff]
        %v398 = vld [vmem:[%s0 + $0x640] sm:$0xff]
        %v399 = vld [vmem:[%s0 + $0x648] sm:$0xff]
        %v400 = vld [vmem:[%s0 + $0x650] sm:$0xff]
        %v401 = vld [vmem:[%s0 + $0x658] sm:$0xff]
        %v402 = vld [vmem:[%s0 + $0x660] sm:$0xff]
        %v403 = vld [vmem:[%s0 + $0x668] sm:$0xff]
        %v404 = vld [vmem:[%s0 + $0x670] sm:$0xff]
        %v405 = vld [vmem:[%s0 + $0x678] sm:$0xff]
        %v406 = vld [vmem:[%s0 + $0x680] sm:$0xff]
        %v407 = vld [vmem:[%s0 + $0x688] sm:$0xff]
        %v408 = vld [vmem:[%s0 + $0x690] sm:$0xff]
        %v409 = vld [vmem:[%s0 + $0x698] sm:$0xff]
        %v410 = vld [vmem:[%s0 + $0x6a0] sm:$0xff]
        %v411 = vld [vmem:[%s0 + $0x6a8] sm:$0xff]
        %v412 = vld [vmem:[%s0 + $0x6b0] sm:$0xff]
        %v413 = vld [vmem:[%s0 + $0x6b8] sm:$0xff]
        %v414 = vld [vmem:[%s0 + $0x6c0] sm:$0xff]
        %v415 = vld [vmem:[%s0 + $0x6c8] sm:$0xff]
        %v416 = vld [vmem:[%s0 + $0x6d0] sm:$0xff]
        %v417 = vld [vmem:[%s0 + $0x6d8] sm:$0xff]
        %v418 = vld [vmem:[%s0 + $0x6e0] sm:$0xff]
        %v419 = vld [vmem:[%s0 + $0x6e8] sm:$0xff]
        %v420 = vld [vmem:[%s0 + $0x6f0] sm:$0xff]
        %v421 = vld [vmem:[%s0 + $0x6f8] sm:$0xff]
        %v422 = vld [vmem:[%s0 + $0x700] sm:$0xff]
        %v423 = vld [vmem:[%s0 + $0x708] sm:$0xff]
        %v424 = vld [vmem:[%s0 + $0x710] sm:$0xff]
        %v425 = vld [vmem:[%s0 + $0x718] sm:$0xff]
        %v426 = vld [vmem:[%s0 + $0x720] sm:$0xff]
        %v427 = vld [vmem:[%s0 + $0x728] sm:$0xff]
        %v428 = vld [vmem:[%s0 + $0x730] sm:$0xff]
        %v429 = vld [vmem:[%s0 + $0x738] sm:$0xff]
        %v430 = vld [vmem:[%s0 + $0x740] sm:$0xff]
        %v431 = vld [vmem:[%s0 + $0x748] sm:$0xff]
        %v432 = vld [vmem:[%s0 + $0x750] sm:$0xff]
        %v433 = vld [vmem:[%s0 + $0x758] sm:$0xff]
        %v434 = vld [vmem:[%s0 + $0x760] sm:$0xff]
        %v435 = vld [vmem:[%s0 + $0x768] sm:$0xff]
        %v436 = vld [vmem:[%s0 + $0x770] sm:$0xff]
        %v437 = vld [vmem:[%s0 + $0x778] sm:$0xff]
        %v438 = vld [vmem:[%s0 + $0x780] sm:$0xff]
        %v439 = vld [vmem:[%s0 + $0x788] sm:$0xff]
        %v440 = vld [vmem:[%s0 + $0x790] sm:$0xff]
        %v441 = vld [vmem:[%s0 + $0x798] sm:$0xff]
        %v442 = vld [vmem:[%s0 + $0x7a0] sm:$0xff]
        %v443 = vld [vmem:[%s0 + $0x7a8] sm:$0xff]
        %v444 = vld [vmem:[%s0 + $0x7b0] sm:$0xff]
        %v445 = vld [vmem:[%s0 + $0x7b8] sm:$0xff]
        %v446 = vld [vmem:[%s0 + $0x7c0] sm:$0xff]
        %v447 = vld [vmem:[%s0 + $0x7c8] sm:$0xff]
        %v448 = vld [vmem:[%s0 + $0x7d0] sm:$0xff]
        %v449 = vld [vmem:[%s0 + $0x7d8] sm:$0xff]
        %v450 = vld [vmem:[%s0 + $0x7e0] sm:$0xff]
        %v451 = vld [vmem:[%s0 + $0x7e8] sm:$0xff]
        %v452 = vld [vmem:[%s0 + $0x7f0] sm:$0xff]
        %v453 = vld [vmem:[%s0 + $0x7f8] sm:$0xff]
        %v454 = vld [vmem:[%s0 + $0x800] sm:$0xff]
        %v455 = vld [vmem:[%s0 + $0x808] sm:$0xff]
        %v456 = vld [vmem:[%s0 + $0x810] sm:$0xff]
        %v457 = vld [vmem:[%s0 + $0x818] sm:$0xff]
        %v458 = vld [vmem:[%s0 + $0x820] sm:$0xff]
        %v459 = vld [vmem:[%s0 + $0x828] sm:$0xff]
        %v460 = vld [vmem:[%s0 + $0x830] sm:$0xff]
        %v461 = vld [vmem:[%s0 + $0x838] sm:$0xff]
        %v462 = vld [vmem:[%s0 + $0x840] sm:$0xff]
        %v463 = vld [vmem:[%s0 + $0x848] sm:$0xff]
        %v464 = vld [vmem:[%s0 + $0x850] sm:$0xff]
        %v465 = vld [vmem:[%s0 + $0x858] sm:$0xff]
        %v466 = vld [vmem:[%s0 + $0x860] sm:$0xff]
        %v467 = vld [vmem:[%s0 + $0x868] sm:$0xff]
        %v468 = vld [vmem:[%s0 + $0x870] sm:$0xff]
        %v469 = vld [vmem:[%s0 + $0x878] sm:$0xff]
        %v470 = vld [vmem:[%s0 + $0x880] sm:$0xff]
        %v471 = vld [vmem:[%s0 + $0x888] sm:$0xff]
        %v472 = vld [vmem:[%s0 + $0x890] sm:$0xff]
        %v473 = vld [vmem:[%s0 + $0x898] sm:$0xff]
        %v474 = vpack.c.bf16 %v200, %v198
        %v475 = vpack.c.bf16 %v201, %v199
        %v476 = vpack.c.bf16 %v204, %v202
        %v477 = vpack.c.bf16 %v205, %v203
        %v478 = vpack.c.bf16 %v208, %v206
        %v479 = vpack.c.bf16 %v209, %v207
        %v480 = vpack.c.bf16 %v212, %v210
        %v481 = vpack.c.bf16 %v213, %v211
        %v482 = vpack.c.bf16 %v216, %v214
        %v483 = vpack.c.bf16 %v217, %v215
        %v484 = vpack.c.bf16 %v220, %v218
        %v485 = vpack.c.bf16 %v221, %v219
        %v486 = vpack.c.bf16 %v224, %v222
        %v487 = vpack.c.bf16 %v225, %v223
        %v488 = vpack.c.bf16 %v228, %v226
        %v489 = vpack.c.bf16 %v229, %v227
        %v490 = vpack.c.bf16 %v232, %v230
        %v491 = vpack.c.bf16 %v233, %v231
        %v492 = vpack.c.bf16 %v236, %v234
        %v493 = vpack.c.bf16 %v237, %v235
        %v494 = vpack.c.bf16 %v240, %v238
        %v495 = vpack.c.bf16 %v241, %v239
        %v496 = vpack.c.bf16 %v244, %v242
        %v497 = vpack.c.bf16 %v245, %v243
        %v498 = vpack.c.bf16 %v248, %v246
        %v499 = vpack.c.bf16 %v249, %v247
        %v500 = vpack.c.bf16 %v252, %v250
        %v501 = vpack.c.bf16 %v253, %v251
        %v502 = vpack.c.bf16 %v256, %v254
        %v503 = vpack.c.bf16 %v257, %v255
        %v504 = vpack.c.bf16 %v260, %v258
        %v505 = vpack.c.bf16 %v261, %v259
        %v506 = vpack.c.bf16 %v264, %v262
        %v507 = vpack.c.bf16 %v265, %v263
        %v508 = vpack.c.bf16 %v268, %v266
        %v509 = vpack.c.bf16 %v269, %v267
        %v510 = vpack.c.bf16 %v272, %v270
        %v511 = vpack.c.bf16 %v273, %v271
        %v512 = vpack.c.bf16 %v276, %v274
        %v513 = vpack.c.bf16 %v277, %v275
        %v514 = vpack.c.bf16 %v280, %v278
        %v515 = vpack.c.bf16 %v281, %v279
        %v516 = vpack.c.bf16 %v284, %v282
        %v517 = vpack.c.bf16 %v285, %v283
        %v518 = vpack.c.bf16 %v288, %v286
        %v519 = vpack.c.bf16 %v289, %v287
        %v520 = vpack.c.bf16 %v292, %v290
        %v521 = vpack.c.bf16 %v293, %v291
        %v522 = vpack.c.bf16 %v296, %v294
        %v523 = vpack.c.bf16 %v297, %v295
        %v524 = vpack.c.bf16 %v300, %v298
        %v525 = vpack.c.bf16 %v301, %v299
        %v526 = vpack.c.bf16 %v304, %v302
        %v527 = vpack.c.bf16 %v305, %v303
        %v528 = vpack.c.bf16 %v308, %v306
        %v529 = vpack.c.bf16 %v309, %v307
        %v530 = vpack.c.bf16 %v312, %v310
        %v531 = vpack.c.bf16 %v313, %v311
        %v532 = vpack.c.bf16 %v316, %v314
        %v533 = vpack.c.bf16 %v317, %v315
        %v534 = vpack.c.bf16 %v320, %v318
        %v535 = vpack.c.bf16 %v321, %v319
        %v536 = vpack.c.bf16 %v324, %v322
        %v537 = vpack.c.bf16 %v325, %v323
        %v538 = vpack.c.bf16 %v328, %v326
        %v539 = vpack.c.bf16 %v329, %v327
        %v540 = vpack.c.bf16 %v332, %v330
        %v541 = vpack.c.bf16 %v333, %v331
        %v542 = vpack.c.bf16 %v336, %v334
        %v543 = vpack.c.bf16 %v337, %v335
        %v544 = vpack.c.bf16 %v340, %v338
        %v545 = vpack.c.bf16 %v341, %v339
        %v546 = vpack.c.bf16 %v344, %v342
        %v547 = vpack.c.bf16 %v345, %v343
        %v548 = vpack.c.bf16 %v348, %v346
        %v549 = vpack.c.bf16 %v349, %v347
        %v550 = vpack.c.bf16 %v352, %v350
        %v551 = vpack.c.bf16 %v353, %v351
        %v552 = vpack.c.bf16 %v356, %v354
        %v553 = vpack.c.bf16 %v357, %v355
        %v554 = vpack.c.bf16 %v360, %v358
        %v555 = vpack.c.bf16 %v361, %v359
        %v556 = vpack.c.bf16 %v364, %v362
        %v557 = vpack.c.bf16 %v365, %v363
        %v558 = vpack.c.bf16 %v368, %v366
        %v559 = vpack.c.bf16 %v369, %v367
        %v560 = vpack.c.bf16 %v372, %v370
        %v561 = vpack.c.bf16 %v373, %v371
        %v562 = vpack.c.bf16 %v376, %v374
        %v563 = vpack.c.bf16 %v377, %v375
        %v564 = vpack.c.bf16 %v380, %v378
        %v565 = vpack.c.bf16 %v381, %v379
        %v566 = vpack.c.bf16 %v384, %v382
        %v567 = vpack.c.bf16 %v385, %v383
        %v568 = vpack.c.bf16 %v388, %v386
        %v569 = vpack.c.bf16 %v389, %v387
        %v570 = vpack.c.bf16 %v392, %v390
        %v571 = vpack.c.bf16 %v393, %v391
        %v572 = vpack.c.bf16 %v396, %v394
        %v573 = vpack.c.bf16 %v397, %v395
        %v574 = vpack.c.bf16 %v400, %v398
        %v575 = vpack.c.bf16 %v401, %v399
        %v576 = vpack.c.bf16 %v404, %v402
        %v577 = vpack.c.bf16 %v405, %v403
        %v578 = vpack.c.bf16 %v408, %v406
        %v579 = vpack.c.bf16 %v409, %v407
        %v580 = vpack.c.bf16 %v412, %v410
        %v581 = vpack.c.bf16 %v413, %v411
        %v582 = vpack.c.bf16 %v416, %v414
        %v583 = vpack.c.bf16 %v417, %v415
        %v584 = vpack.c.bf16 %v420, %v418
        %v585 = vpack.c.bf16 %v421, %v419
        %v586 = vpack.c.bf16 %v424, %v422
        %v587 = vpack.c.bf16 %v425, %v423
        %v588 = vpack.c.bf16 %v428, %v426
        %v589 = vpack.c.bf16 %v429, %v427
        %v590 = vpack.c.bf16 %v432, %v430
        %v591 = vpack.c.bf16 %v433, %v431
        %v592 = vpack.c.bf16 %v436, %v434
        %v593 = vpack.c.bf16 %v437, %v435
        %v594 = vpack.c.bf16 %v440, %v438
        %v595 = vpack.c.bf16 %v441, %v439
        %v596 = vpack.c.bf16 %v444, %v442
        %v597 = vpack.c.bf16 %v445, %v443
        %v598 = vpack.c.bf16 %v448, %v446
        %v599 = vpack.c.bf16 %v449, %v447
        %v600 = vpack.c.bf16 %v452, %v450
        %v601 = vpack.c.bf16 %v453, %v451
        %v602 = vpack.c.bf16 %v456, %v454
        %v603 = vpack.c.bf16 %v457, %v455
        %v604 = vpack.c.bf16 %v460, %v458
        %v605 = vpack.c.bf16 %v461, %v459
        %v606 = vpack.c.bf16 %v464, %v462
        %v607 = vpack.c.bf16 %v465, %v463
        %v608 = vpack.c.bf16 %v468, %v466
        %v609 = vpack.c.bf16 %v469, %v467
        %v610 = vpack.c.bf16 %v472, %v470
        %v611 = vpack.c.bf16 %v473, %v471
        %v612 = vld [vmem:[%s188] sm:$0xff]
        %v613 = vld [vmem:[%s188 + $0x8] sm:$0xff]
        %v614 = vld [vmem:[%s188 + $0x10] sm:$0xff]
        %v615 = vld [vmem:[%s188 + $0x18] sm:$0xff]
        %v616 = vld [vmem:[%s188 + $0x20] sm:$0xf]
        %v617 = vld [vmem:[%s188 + $0x24] sm:$0xff]
        %v618 = vld [vmem:[%s188 + $0x2c] sm:$0xff]
        %v619 = vld [vmem:[%s188 + $0x34] sm:$0xff]
        %v620 = vld [vmem:[%s188 + $0x3c] sm:$0xff]
        %v621 = vld [vmem:[%s188 + $0x44] sm:$0xf]
        %v622 = vld [vmem:[%s188 + $0x48] sm:$0xff]
        %v623 = vld [vmem:[%s188 + $0x50] sm:$0xff]
        %v624 = vld [vmem:[%s188 + $0x58] sm:$0xff]
        %v625 = vld [vmem:[%s188 + $0x60] sm:$0xff]
        %v626 = vld [vmem:[%s188 + $0x68] sm:$0xf]
        %v627 = vld [vmem:[%s188 + $0x6c] sm:$0xff]
        %v628 = vld [vmem:[%s188 + $0x74] sm:$0xff]
        %v629 = vld [vmem:[%s188 + $0x7c] sm:$0xff]
        %v630 = vld [vmem:[%s188 + $0x84] sm:$0xff]
        %v631 = vld [vmem:[%s188 + $0x8c] sm:$0xf]
        %v632 = vld [vmem:[%s188 + $0x90] sm:$0xff]
        %v633 = vld [vmem:[%s188 + $0x98] sm:$0xff]
        %v634 = vld [vmem:[%s188 + $0xa0] sm:$0xff]
        %v635 = vld [vmem:[%s188 + $0xa8] sm:$0xff]
        %v636 = vld [vmem:[%s188 + $0xb0] sm:$0xf]
        %v637 = vld [vmem:[%s188 + $0xb4] sm:$0xff]
        %v638 = vld [vmem:[%s188 + $0xbc] sm:$0xff]
        %v639 = vld [vmem:[%s188 + $0xc4] sm:$0xff]
        %v640 = vld [vmem:[%s188 + $0xcc] sm:$0xff]
        %v641 = vld [vmem:[%s188 + $0xd4] sm:$0xf]
        %v642 = vld [vmem:[%s188 + $0xd8] sm:$0xff]
        %v643 = vld [vmem:[%s188 + $0xe0] sm:$0xff]
        %v644 = vld [vmem:[%s188 + $0xe8] sm:$0xff]
        %v645 = vld [vmem:[%s188 + $0xf0] sm:$0xff]
        %v646 = vld [vmem:[%s188 + $0xf8] sm:$0xf]
        %v647 = vld [vmem:[%s188 + $0xfc] sm:$0xff]
        %v648 = vld [vmem:[%s188 + $0x104] sm:$0xff]
        %v649 = vld [vmem:[%s188 + $0x10c] sm:$0xff]
        %v650 = vld [vmem:[%s188 + $0x114] sm:$0xff]
        %v651 = vld [vmem:[%s188 + $0x11c] sm:$0xf]
        %v652 = vld [vmem:[%s188 + $0x120] sm:$0xff]
        %v653 = vld [vmem:[%s188 + $0x128] sm:$0xff]
        %v654 = vld [vmem:[%s188 + $0x130] sm:$0xff]
        %v655 = vld [vmem:[%s188 + $0x138] sm:$0xff]
        %v656 = vld [vmem:[%s188 + $0x140] sm:$0xf]
        %v657 = vld [vmem:[%s188 + $0x144] sm:$0xff]
        %v658 = vld [vmem:[%s188 + $0x14c] sm:$0xff]
        %v659 = vld [vmem:[%s188 + $0x154] sm:$0xff]
        %v660 = vld [vmem:[%s188 + $0x15c] sm:$0xff]
        %v661 = vld [vmem:[%s188 + $0x164] sm:$0xf]
        %v662 = vld [vmem:[%s188 + $0x168] sm:$0xff]
        %v663 = vld [vmem:[%s188 + $0x170] sm:$0xff]
        %v664 = vld [vmem:[%s188 + $0x178] sm:$0xff]
        %v665 = vld [vmem:[%s188 + $0x180] sm:$0xff]
        %v666 = vld [vmem:[%s188 + $0x188] sm:$0xf]
        %v667 = vld [vmem:[%s188 + $0x18c] sm:$0xff]
        %v668 = vld [vmem:[%s188 + $0x194] sm:$0xff]
        %v669 = vld [vmem:[%s188 + $0x19c] sm:$0xff]
        %v670 = vld [vmem:[%s188 + $0x1a4] sm:$0xff]
        %v671 = vld [vmem:[%s188 + $0x1ac] sm:$0xf]
        %v732 = vunpack.c.l.b16 %v612
        %v733 = vunpack.c.h.b16 %v612
        %v734 = vunpack.c.l.b16 %v613
        %v735 = vunpack.c.h.b16 %v613
        %v736 = vunpack.c.l.b16 %v614
        %v737 = vunpack.c.h.b16 %v614
        %v738 = vunpack.c.l.b16 %v615
        %v739 = vunpack.c.h.b16 %v615
        %v740 = vunpack.c.l.b16 %v616
        %v741 = vunpack.c.l.b16 %v617
        %v742 = vunpack.c.h.b16 %v617
        %v743 = vunpack.c.l.b16 %v618
        %v744 = vunpack.c.h.b16 %v618
        %v745 = vunpack.c.l.b16 %v619
        %v746 = vunpack.c.h.b16 %v619
        %v747 = vunpack.c.l.b16 %v620
        %v748 = vunpack.c.h.b16 %v620
        %v749 = vunpack.c.l.b16 %v621
        %v750 = vunpack.c.l.b16 %v622
        %v751 = vunpack.c.h.b16 %v622
        %v752 = vunpack.c.l.b16 %v623
        %v753 = vunpack.c.h.b16 %v623
        %v754 = vunpack.c.l.b16 %v624
        %v755 = vunpack.c.h.b16 %v624
        %v756 = vunpack.c.l.b16 %v625
        %v757 = vunpack.c.h.b16 %v625
        %v758 = vunpack.c.l.b16 %v626
        %v759 = vunpack.c.l.b16 %v627
        %v760 = vunpack.c.h.b16 %v627
        %v761 = vunpack.c.l.b16 %v628
        %v762 = vunpack.c.h.b16 %v628
        %v763 = vunpack.c.l.b16 %v629
        %v764 = vunpack.c.h.b16 %v629
        %v765 = vunpack.c.l.b16 %v630
        %v766 = vunpack.c.h.b16 %v630
        %v767 = vunpack.c.l.b16 %v631
        %v768 = vunpack.c.l.b16 %v632
        %v769 = vunpack.c.h.b16 %v632
        %v770 = vunpack.c.l.b16 %v633
        %v771 = vunpack.c.h.b16 %v633
        %v772 = vunpack.c.l.b16 %v634
        %v773 = vunpack.c.h.b16 %v634
        %v774 = vunpack.c.l.b16 %v635
        %v775 = vunpack.c.h.b16 %v635
        %v776 = vunpack.c.l.b16 %v636
        %v777 = vunpack.c.l.b16 %v637
        %v778 = vunpack.c.h.b16 %v637
        %v779 = vunpack.c.l.b16 %v638
        %v780 = vunpack.c.h.b16 %v638
        %v781 = vunpack.c.l.b16 %v639
        %v782 = vunpack.c.h.b16 %v639
        %v783 = vunpack.c.l.b16 %v640
        %v784 = vunpack.c.h.b16 %v640
        %v785 = vunpack.c.l.b16 %v641
        %v786 = vunpack.c.l.b16 %v642
        %v787 = vunpack.c.h.b16 %v642
        %v788 = vunpack.c.l.b16 %v643
        %v789 = vunpack.c.h.b16 %v643
        %v790 = vunpack.c.l.b16 %v644
        %v791 = vunpack.c.h.b16 %v644
        %v792 = vunpack.c.l.b16 %v645
        %v793 = vunpack.c.h.b16 %v645
        %v794 = vunpack.c.l.b16 %v646
        %v795 = vunpack.c.l.b16 %v647
        %v796 = vunpack.c.h.b16 %v647
        %v797 = vunpack.c.l.b16 %v648
        %v798 = vunpack.c.h.b16 %v648
        %v799 = vunpack.c.l.b16 %v649
        %v800 = vunpack.c.h.b16 %v649
        %v801 = vunpack.c.l.b16 %v650
        %v802 = vunpack.c.h.b16 %v650
        %v803 = vunpack.c.l.b16 %v651
        %v804 = vunpack.c.l.b16 %v652
        %v805 = vunpack.c.h.b16 %v652
        %v806 = vunpack.c.l.b16 %v653
        %v807 = vunpack.c.h.b16 %v653
        %v808 = vunpack.c.l.b16 %v654
        %v809 = vunpack.c.h.b16 %v654
        %v810 = vunpack.c.l.b16 %v655
        %v811 = vunpack.c.h.b16 %v655
        %v812 = vunpack.c.l.b16 %v656
        %v813 = vunpack.c.l.b16 %v657
        %v814 = vunpack.c.h.b16 %v657
        %v815 = vunpack.c.l.b16 %v658
        %v816 = vunpack.c.h.b16 %v658
        %v817 = vunpack.c.l.b16 %v659
        %v818 = vunpack.c.h.b16 %v659
        %v819 = vunpack.c.l.b16 %v660
        %v820 = vunpack.c.h.b16 %v660
        %v821 = vunpack.c.l.b16 %v661
        %v822 = vunpack.c.l.b16 %v662
        %v823 = vunpack.c.h.b16 %v662
        %v824 = vunpack.c.l.b16 %v663
        %v825 = vunpack.c.h.b16 %v663
        %v826 = vunpack.c.l.b16 %v664
        %v827 = vunpack.c.h.b16 %v664
        %v828 = vunpack.c.l.b16 %v665
        %v829 = vunpack.c.h.b16 %v665
        %v830 = vunpack.c.l.b16 %v666
        %v831 = vunpack.c.l.b16 %v667
        %v832 = vunpack.c.h.b16 %v667
        %v833 = vunpack.c.l.b16 %v668
        %v834 = vunpack.c.h.b16 %v668
        %v835 = vunpack.c.l.b16 %v669
        %v836 = vunpack.c.h.b16 %v669
        %v837 = vunpack.c.l.b16 %v670
        %v838 = vunpack.c.h.b16 %v670
        %v839 = vunpack.c.l.b16 %v671
        %v840 = vpack.c.b16 %v741, %v732
        %v841 = vpack.c.b16 %v742, %v733
        %v842 = vpack.c.b16 %v743, %v734
        %v843 = vpack.c.b16 %v744, %v735
        %v844 = vpack.c.b16 %v745, %v736
        %v845 = vpack.c.b16 %v746, %v737
        %v846 = vpack.c.b16 %v747, %v738
        %v847 = vpack.c.b16 %v748, %v739
        %v848 = vpack.c.b16 %v749, %v740
        %v849 = vpack.c.b16 %v759, %v750
        %v850 = vpack.c.b16 %v760, %v751
        %v851 = vpack.c.b16 %v761, %v752
        %v852 = vpack.c.b16 %v762, %v753
        %v853 = vpack.c.b16 %v763, %v754
        %v854 = vpack.c.b16 %v764, %v755
        %v855 = vpack.c.b16 %v765, %v756
        %v856 = vpack.c.b16 %v766, %v757
        %v857 = vpack.c.b16 %v767, %v758
        %v858 = vpack.c.b16 %v777, %v768
        %v859 = vpack.c.b16 %v778, %v769
        %v860 = vpack.c.b16 %v779, %v770
        %v861 = vpack.c.b16 %v780, %v771
        %v862 = vpack.c.b16 %v781, %v772
        %v863 = vpack.c.b16 %v782, %v773
        %v864 = vpack.c.b16 %v783, %v774
        %v865 = vpack.c.b16 %v784, %v775
        %v866 = vpack.c.b16 %v785, %v776
        %v867 = vpack.c.b16 %v795, %v786
        %v868 = vpack.c.b16 %v796, %v787
        %v869 = vpack.c.b16 %v797, %v788
        %v870 = vpack.c.b16 %v798, %v789
        %v871 = vpack.c.b16 %v799, %v790
        %v872 = vpack.c.b16 %v800, %v791
        %v873 = vpack.c.b16 %v801, %v792
        %v874 = vpack.c.b16 %v802, %v793
        %v875 = vpack.c.b16 %v803, %v794
        %v876 = vpack.c.b16 %v813, %v804
        %v877 = vpack.c.b16 %v814, %v805
        %v878 = vpack.c.b16 %v815, %v806
        %v879 = vpack.c.b16 %v816, %v807
        %v880 = vpack.c.b16 %v817, %v808
        %v881 = vpack.c.b16 %v818, %v809
        %v882 = vpack.c.b16 %v819, %v810
        %v883 = vpack.c.b16 %v820, %v811
        %v884 = vpack.c.b16 %v821, %v812
        %v885 = vpack.c.b16 %v831, %v822
        %v886 = vpack.c.b16 %v832, %v823
        %v887 = vpack.c.b16 %v833, %v824
        %v888 = vpack.c.b16 %v834, %v825
        %v889 = vpack.c.b16 %v835, %v826
        %v890 = vpack.c.b16 %v836, %v827
        %v891 = vpack.c.b16 %v837, %v828
        %v892 = vpack.c.b16 %v838, %v829
        %v893 = vpack.c.b16 %v839, %v830
        %vm942 = vcmask 654336
        %v944 = vsel %vm942, %v848, 0
        %v947 = vsel %vm942, %v857, 0
        %v950 = vsel %vm942, %v866, 0
        %v953 = vsel %vm942, %v875, 0
        %v956 = vsel %vm942, %v884, 0
        %v959 = vsel %vm942, %v893, 0
        %961 = vmatprep.subr.bf16.mxu0 %v489
        %962 = vmatpush1.bf16.msra.mxu0 %v488
        %963 = vmatprep.subr.bf16.mxu0 %v487
        %964 = vmatpush1.bf16.msra.mxu0 %v486
        %965 = vmatprep.subr.bf16.mxu0 %v485
        %966 = vmatpush1.bf16.msra.mxu0 %v484
        %967 = vmatprep.subr.bf16.mxu0 %v483
        %968 = vmatpush1.bf16.msra.mxu0 %v482
        %969 = vmatprep.subr.bf16.mxu0 %v481
        %970 = vmatpush1.bf16.msra.mxu0 %v480
        %971 = vmatprep.subr.bf16.mxu0 %v479
        %972 = vmatpush1.bf16.msra.mxu0 %v478
        %973 = vmatprep.subr.bf16.mxu0 %v477
        %974 = vmatpush1.bf16.msra.mxu0 %v476
        %975 = vmatprep.subr.bf16.mxu0 %v475
        %976 = vmatpush1.bf16.msra.mxu0 %v474
        %977 = vmatprep.subr.bf16.mxu0 %v505
        %978 = vmatpush2.bf16.msra.mxu0 %v504
        %979 = vmatprep.subr.bf16.mxu0 %v503
        %980 = vmatpush2.bf16.msra.mxu0 %v502
        %981 = vmatprep.subr.bf16.mxu0 %v501
        %982 = vmatpush2.bf16.msra.mxu0 %v500
        %983 = vmatprep.subr.bf16.mxu0 %v499
        %984 = vmatpush2.bf16.msra.mxu0 %v498
        %985 = vmatprep.subr.bf16.mxu0 %v497
        %986 = vmatpush2.bf16.msra.mxu0 %v496
        %987 = vmatprep.subr.bf16.mxu0 %v495
        %988 = vmatpush2.bf16.msra.mxu0 %v494
        %989 = vmatprep.subr.bf16.mxu0 %v493
        %990 = vmatpush2.bf16.msra.mxu0 %v492
        %991 = vmatprep.subr.bf16.mxu0 %v491
        %992 = vmatpush2.bf16.msra.mxu0 %v490
        %993 = vmatprep.mubr.bf16.mxu0 %v841
        %994 = vmatmul.mubr.bf16.gmra.mxu0 %v840
        %v995 = vpop.f32.mrf.mxu0
        %v996 = vadd.f32 0.0, %v995
        %v997 = vpop.f32.mrf.mxu0
        %v998 = vadd.f32 0.0, %v997
        %v999 = vpop.f32.mrf.mxu0
        %v1000 = vadd.f32 0.0, %v999
        %v1001 = vpop.f32.mrf.mxu0
        %v1002 = vadd.f32 0.0, %v1001
        %1003 = vmatprep.mubr.bf16.mxu0 %v850
        %1004 = vmatmul.mubr.bf16.gmra.mxu0 %v849
        %v1005 = vpop.f32.mrf.mxu0
        %v1006 = vadd.f32 0.0, %v1005
        %v1007 = vpop.f32.mrf.mxu0
        %v1008 = vadd.f32 0.0, %v1007
        %v1009 = vpop.f32.mrf.mxu0
        %v1010 = vadd.f32 0.0, %v1009
        %v1011 = vpop.f32.mrf.mxu0
        %v1012 = vadd.f32 0.0, %v1011
        %1013 = vmatprep.mubr.bf16.mxu0 %v859
        %1014 = vmatmul.mubr.bf16.gmra.mxu0 %v858
        %v1015 = vpop.f32.mrf.mxu0
        %v1016 = vadd.f32 0.0, %v1015
        %v1017 = vpop.f32.mrf.mxu0
        %v1018 = vadd.f32 0.0, %v1017
        %v1019 = vpop.f32.mrf.mxu0
        %v1020 = vadd.f32 0.0, %v1019
        %v1021 = vpop.f32.mrf.mxu0
        %v1022 = vadd.f32 0.0, %v1021
        %1023 = vmatprep.mubr.bf16.mxu0 %v868
        %1024 = vmatmul.mubr.bf16.gmra.mxu0 %v867
        %v1025 = vpop.f32.mrf.mxu0
        %v1026 = vadd.f32 0.0, %v1025
        %v1027 = vpop.f32.mrf.mxu0
        %v1028 = vadd.f32 0.0, %v1027
        %v1029 = vpop.f32.mrf.mxu0
        %v1030 = vadd.f32 0.0, %v1029
        %v1031 = vpop.f32.mrf.mxu0
        %v1032 = vadd.f32 0.0, %v1031
        %1033 = vmatprep.mubr.bf16.mxu0 %v877
        %1034 = vmatmul.mubr.bf16.gmra.mxu0 %v876
        %v1035 = vpop.f32.mrf.mxu0
        %v1036 = vadd.f32 0.0, %v1035
        %v1037 = vpop.f32.mrf.mxu0
        %v1038 = vadd.f32 0.0, %v1037
        %v1039 = vpop.f32.mrf.mxu0
        %v1040 = vadd.f32 0.0, %v1039
        %v1041 = vpop.f32.mrf.mxu0
        %v1042 = vadd.f32 0.0, %v1041
        %1043 = vmatprep.mubr.bf16.mxu0 %v886
        %1044 = vmatmul.mubr.bf16.gmra.mxu0 %v885
        %v1045 = vpop.f32.mrf.mxu0
        %v1046 = vadd.f32 0.0, %v1045
        %v1047 = vpop.f32.mrf.mxu0
        %v1048 = vadd.f32 0.0, %v1047
        %v1049 = vpop.f32.mrf.mxu0
        %v1050 = vadd.f32 0.0, %v1049
        %v1051 = vpop.f32.mrf.mxu0
        %v1052 = vadd.f32 0.0, %v1051
        %1053 = vdwg.mxu0
        %1054 = vmatprep.subr.bf16.mxu0 %v521
        %1055 = vmatpush1.bf16.msra.mxu0 %v520
        %1056 = vmatprep.subr.bf16.mxu0 %v519
        %1057 = vmatpush1.bf16.msra.mxu0 %v518
        %1058 = vmatprep.subr.bf16.mxu0 %v517
        %1059 = vmatpush1.bf16.msra.mxu0 %v516
        %1060 = vmatprep.subr.bf16.mxu0 %v515
        %1061 = vmatpush1.bf16.msra.mxu0 %v514
        %1062 = vmatprep.subr.bf16.mxu0 %v513
        %1063 = vmatpush1.bf16.msra.mxu0 %v512
        %1064 = vmatprep.subr.bf16.mxu0 %v511
        %1065 = vmatpush1.bf16.msra.mxu0 %v510
        %1066 = vmatprep.subr.bf16.mxu0 %v509
        %1067 = vmatpush1.bf16.msra.mxu0 %v508
        %1068 = vmatprep.subr.bf16.mxu0 %v507
        %1069 = vmatpush1.bf16.msra.mxu0 %v506
        %1070 = vmatprep.subr.bf16.mxu0 %v537
        %1071 = vmatpush2.bf16.msra.mxu0 %v536
        %1072 = vmatprep.subr.bf16.mxu0 %v535
        %1073 = vmatpush2.bf16.msra.mxu0 %v534
        %1074 = vmatprep.subr.bf16.mxu0 %v533
        %1075 = vmatpush2.bf16.msra.mxu0 %v532
        %1076 = vmatprep.subr.bf16.mxu0 %v531
        %1077 = vmatpush2.bf16.msra.mxu0 %v530
        %1078 = vmatprep.subr.bf16.mxu0 %v529
        %1079 = vmatpush2.bf16.msra.mxu0 %v528
        %1080 = vmatprep.subr.bf16.mxu0 %v527
        %1081 = vmatpush2.bf16.msra.mxu0 %v526
        %1082 = vmatprep.subr.bf16.mxu0 %v525
        %1083 = vmatpush2.bf16.msra.mxu0 %v524
        %1084 = vmatprep.subr.bf16.mxu0 %v523
        %1085 = vmatpush2.bf16.msra.mxu0 %v522
        %1086 = vmatprep.mubr.bf16.mxu0 %v843
        %1087 = vmatmul.mubr.bf16.gmra.mxu0 %v842
        %v1088 = vpop.f32.mrf.mxu0
        %v1089 = vadd.f32 %v996, %v1088
        %v1090 = vpop.f32.mrf.mxu0
        %v1091 = vadd.f32 %v998, %v1090
        %v1092 = vpop.f32.mrf.mxu0
        %v1093 = vadd.f32 %v1000, %v1092
        %v1094 = vpop.f32.mrf.mxu0
        %v1095 = vadd.f32 %v1002, %v1094
        %1096 = vmatprep.mubr.bf16.mxu0 %v852
        %1097 = vmatmul.mubr.bf16.gmra.mxu0 %v851
        %v1098 = vpop.f32.mrf.mxu0
        %v1099 = vadd.f32 %v1006, %v1098
        %v1100 = vpop.f32.mrf.mxu0
        %v1101 = vadd.f32 %v1008, %v1100
        %v1102 = vpop.f32.mrf.mxu0
        %v1103 = vadd.f32 %v1010, %v1102
        %v1104 = vpop.f32.mrf.mxu0
        %v1105 = vadd.f32 %v1012, %v1104
        %1106 = vmatprep.mubr.bf16.mxu0 %v861
        %1107 = vmatmul.mubr.bf16.gmra.mxu0 %v860
        %v1108 = vpop.f32.mrf.mxu0
        %v1109 = vadd.f32 %v1016, %v1108
        %v1110 = vpop.f32.mrf.mxu0
        %v1111 = vadd.f32 %v1018, %v1110
        %v1112 = vpop.f32.mrf.mxu0
        %v1113 = vadd.f32 %v1020, %v1112
        %v1114 = vpop.f32.mrf.mxu0
        %v1115 = vadd.f32 %v1022, %v1114
        %1116 = vmatprep.mubr.bf16.mxu0 %v870
        %1117 = vmatmul.mubr.bf16.gmra.mxu0 %v869
        %v1118 = vpop.f32.mrf.mxu0
        %v1119 = vadd.f32 %v1026, %v1118
        %v1120 = vpop.f32.mrf.mxu0
        %v1121 = vadd.f32 %v1028, %v1120
        %v1122 = vpop.f32.mrf.mxu0
        %v1123 = vadd.f32 %v1030, %v1122
        %v1124 = vpop.f32.mrf.mxu0
        %v1125 = vadd.f32 %v1032, %v1124
        %1126 = vmatprep.mubr.bf16.mxu0 %v879
        %1127 = vmatmul.mubr.bf16.gmra.mxu0 %v878
        %v1128 = vpop.f32.mrf.mxu0
        %v1129 = vadd.f32 %v1036, %v1128
        %v1130 = vpop.f32.mrf.mxu0
        %v1131 = vadd.f32 %v1038, %v1130
        %v1132 = vpop.f32.mrf.mxu0
        %v1133 = vadd.f32 %v1040, %v1132
        %v1134 = vpop.f32.mrf.mxu0
        %v1135 = vadd.f32 %v1042, %v1134
        %1136 = vmatprep.mubr.bf16.mxu0 %v888
        %1137 = vmatmul.mubr.bf16.gmra.mxu0 %v887
        %v1138 = vpop.f32.mrf.mxu0
        %v1139 = vadd.f32 %v1046, %v1138
        %v1140 = vpop.f32.mrf.mxu0
        %v1141 = vadd.f32 %v1048, %v1140
        %v1142 = vpop.f32.mrf.mxu0
        %v1143 = vadd.f32 %v1050, %v1142
        %v1144 = vpop.f32.mrf.mxu0
        %v1145 = vadd.f32 %v1052, %v1144
        %1146 = vdwg.mxu0
        %1147 = vmatprep.subr.bf16.mxu0 %v553
        %1148 = vmatpush1.bf16.msra.mxu0 %v552
        %1149 = vmatprep.subr.bf16.mxu0 %v551
        %1150 = vmatpush1.bf16.msra.mxu0 %v550
        %1151 = vmatprep.subr.bf16.mxu0 %v549
        %1152 = vmatpush1.bf16.msra.mxu0 %v548
        %1153 = vmatprep.subr.bf16.mxu0 %v547
        %1154 = vmatpush1.bf16.msra.mxu0 %v546
        %1155 = vmatprep.subr.bf16.mxu0 %v545
        %1156 = vmatpush1.bf16.msra.mxu0 %v544
        %1157 = vmatprep.subr.bf16.mxu0 %v543
        %1158 = vmatpush1.bf16.msra.mxu0 %v542
        %1159 = vmatprep.subr.bf16.mxu0 %v541
        %1160 = vmatpush1.bf16.msra.mxu0 %v540
        %1161 = vmatprep.subr.bf16.mxu0 %v539
        %1162 = vmatpush1.bf16.msra.mxu0 %v538
        %1163 = vmatprep.subr.bf16.mxu0 %v569
        %1164 = vmatpush2.bf16.msra.mxu0 %v568
        %1165 = vmatprep.subr.bf16.mxu0 %v567
        %1166 = vmatpush2.bf16.msra.mxu0 %v566
        %1167 = vmatprep.subr.bf16.mxu0 %v565
        %1168 = vmatpush2.bf16.msra.mxu0 %v564
        %1169 = vmatprep.subr.bf16.mxu0 %v563
        %1170 = vmatpush2.bf16.msra.mxu0 %v562
        %1171 = vmatprep.subr.bf16.mxu0 %v561
        %1172 = vmatpush2.bf16.msra.mxu0 %v560
        %1173 = vmatprep.subr.bf16.mxu0 %v559
        %1174 = vmatpush2.bf16.msra.mxu0 %v558
        %1175 = vmatprep.subr.bf16.mxu0 %v557
        %1176 = vmatpush2.bf16.msra.mxu0 %v556
        %1177 = vmatprep.subr.bf16.mxu0 %v555
        %1178 = vmatpush2.bf16.msra.mxu0 %v554
        %1179 = vmatprep.mubr.bf16.mxu0 %v845
        %1180 = vmatmul.mubr.bf16.gmra.mxu0 %v844
        %v1181 = vpop.f32.mrf.mxu0
        %v1182 = vadd.f32 %v1089, %v1181
        %v1183 = vpop.f32.mrf.mxu0
        %v1184 = vadd.f32 %v1091, %v1183
        %v1185 = vpop.f32.mrf.mxu0
        %v1186 = vadd.f32 %v1093, %v1185
        %v1187 = vpop.f32.mrf.mxu0
        %v1188 = vadd.f32 %v1095, %v1187
        %1189 = vmatprep.mubr.bf16.mxu0 %v854
        %1190 = vmatmul.mubr.bf16.gmra.mxu0 %v853
        %v1191 = vpop.f32.mrf.mxu0
        %v1192 = vadd.f32 %v1099, %v1191
        %v1193 = vpop.f32.mrf.mxu0
        %v1194 = vadd.f32 %v1101, %v1193
        %v1195 = vpop.f32.mrf.mxu0
        %v1196 = vadd.f32 %v1103, %v1195
        %v1197 = vpop.f32.mrf.mxu0
        %v1198 = vadd.f32 %v1105, %v1197
        %1199 = vmatprep.mubr.bf16.mxu0 %v863
        %1200 = vmatmul.mubr.bf16.gmra.mxu0 %v862
        %v1201 = vpop.f32.mrf.mxu0
        %v1202 = vadd.f32 %v1109, %v1201
        %v1203 = vpop.f32.mrf.mxu0
        %v1204 = vadd.f32 %v1111, %v1203
        %v1205 = vpop.f32.mrf.mxu0
        %v1206 = vadd.f32 %v1113, %v1205
        %v1207 = vpop.f32.mrf.mxu0
        %v1208 = vadd.f32 %v1115, %v1207
        %1209 = vmatprep.mubr.bf16.mxu0 %v872
        %1210 = vmatmul.mubr.bf16.gmra.mxu0 %v871
        %v1211 = vpop.f32.mrf.mxu0
        %v1212 = vadd.f32 %v1119, %v1211
        %v1213 = vpop.f32.mrf.mxu0
        %v1214 = vadd.f32 %v1121, %v1213
        %v1215 = vpop.f32.mrf.mxu0
        %v1216 = vadd.f32 %v1123, %v1215
        %v1217 = vpop.f32.mrf.mxu0
        %v1218 = vadd.f32 %v1125, %v1217
        %1219 = vmatprep.mubr.bf16.mxu0 %v881
        %1220 = vmatmul.mubr.bf16.gmra.mxu0 %v880
        %v1221 = vpop.f32.mrf.mxu0
        %v1222 = vadd.f32 %v1129, %v1221
        %v1223 = vpop.f32.mrf.mxu0
        %v1224 = vadd.f32 %v1131, %v1223
        %v1225 = vpop.f32.mrf.mxu0
        %v1226 = vadd.f32 %v1133, %v1225
        %v1227 = vpop.f32.mrf.mxu0
        %v1228 = vadd.f32 %v1135, %v1227
        %1229 = vmatprep.mubr.bf16.mxu0 %v890
        %1230 = vmatmul.mubr.bf16.gmra.mxu0 %v889
        %v1231 = vpop.f32.mrf.mxu0
        %v1232 = vadd.f32 %v1139, %v1231
        %v1233 = vpop.f32.mrf.mxu0
        %v1234 = vadd.f32 %v1141, %v1233
        %v1235 = vpop.f32.mrf.mxu0
        %v1236 = vadd.f32 %v1143, %v1235
        %v1237 = vpop.f32.mrf.mxu0
        %v1238 = vadd.f32 %v1145, %v1237
        %1239 = vdwg.mxu0
        %1240 = vmatprep.subr.bf16.mxu0 %v585
        %1241 = vmatpush1.bf16.msra.mxu0 %v584
        %1242 = vmatprep.subr.bf16.mxu0 %v583
        %1243 = vmatpush1.bf16.msra.mxu0 %v582
        %1244 = vmatprep.subr.bf16.mxu0 %v581
        %1245 = vmatpush1.bf16.msra.mxu0 %v580
        %1246 = vmatprep.subr.bf16.mxu0 %v579
        %1247 = vmatpush1.bf16.msra.mxu0 %v578
        %1248 = vmatprep.subr.bf16.mxu0 %v577
        %1249 = vmatpush1.bf16.msra.mxu0 %v576
        %1250 = vmatprep.subr.bf16.mxu0 %v575
        %1251 = vmatpush1.bf16.msra.mxu0 %v574
        %1252 = vmatprep.subr.bf16.mxu0 %v573
        %1253 = vmatpush1.bf16.msra.mxu0 %v572
        %1254 = vmatprep.subr.bf16.mxu0 %v571
        %1255 = vmatpush1.bf16.msra.mxu0 %v570
        %1256 = vmatprep.subr.bf16.mxu0 %v601
        %1257 = vmatpush2.bf16.msra.mxu0 %v600
        %1258 = vmatprep.subr.bf16.mxu0 %v599
        %1259 = vmatpush2.bf16.msra.mxu0 %v598
        %1260 = vmatprep.subr.bf16.mxu0 %v597
        %1261 = vmatpush2.bf16.msra.mxu0 %v596
        %1262 = vmatprep.subr.bf16.mxu0 %v595
        %1263 = vmatpush2.bf16.msra.mxu0 %v594
        %1264 = vmatprep.subr.bf16.mxu0 %v593
        %1265 = vmatpush2.bf16.msra.mxu0 %v592
        %1266 = vmatprep.subr.bf16.mxu0 %v591
        %1267 = vmatpush2.bf16.msra.mxu0 %v590
        %1268 = vmatprep.subr.bf16.mxu0 %v589
        %1269 = vmatpush2.bf16.msra.mxu0 %v588
        %1270 = vmatprep.subr.bf16.mxu0 %v587
        %1271 = vmatpush2.bf16.msra.mxu0 %v586
        %1272 = vmatprep.mubr.bf16.mxu0 %v847
        %1273 = vmatmul.mubr.bf16.gmra.mxu0 %v846
        %v1274 = vpop.f32.mrf.mxu0
        %v1275 = vadd.f32 %v1182, %v1274
        %v1276 = vpop.f32.mrf.mxu0
        %v1277 = vadd.f32 %v1184, %v1276
        %v1278 = vpop.f32.mrf.mxu0
        %v1279 = vadd.f32 %v1186, %v1278
        %v1280 = vpop.f32.mrf.mxu0
        %v1281 = vadd.f32 %v1188, %v1280
        %1282 = vmatprep.mubr.bf16.mxu0 %v856
        %1283 = vmatmul.mubr.bf16.gmra.mxu0 %v855
        %v1284 = vpop.f32.mrf.mxu0
        %v1285 = vadd.f32 %v1192, %v1284
        %v1286 = vpop.f32.mrf.mxu0
        %v1287 = vadd.f32 %v1194, %v1286
        %v1288 = vpop.f32.mrf.mxu0
        %v1289 = vadd.f32 %v1196, %v1288
        %v1290 = vpop.f32.mrf.mxu0
        %v1291 = vadd.f32 %v1198, %v1290
        %1292 = vmatprep.mubr.bf16.mxu0 %v865
        %1293 = vmatmul.mubr.bf16.gmra.mxu0 %v864
        %v1294 = vpop.f32.mrf.mxu0
        %v1295 = vadd.f32 %v1202, %v1294
        %v1296 = vpop.f32.mrf.mxu0
        %v1297 = vadd.f32 %v1204, %v1296
        %v1298 = vpop.f32.mrf.mxu0
        %v1299 = vadd.f32 %v1206, %v1298
        %v1300 = vpop.f32.mrf.mxu0
        %v1301 = vadd.f32 %v1208, %v1300
        %1302 = vmatprep.mubr.bf16.mxu0 %v874
        %1303 = vmatmul.mubr.bf16.gmra.mxu0 %v873
        %v1304 = vpop.f32.mrf.mxu0
        %v1305 = vadd.f32 %v1212, %v1304
        %v1306 = vpop.f32.mrf.mxu0
        %v1307 = vadd.f32 %v1214, %v1306
        %v1308 = vpop.f32.mrf.mxu0
        %v1309 = vadd.f32 %v1216, %v1308
        %v1310 = vpop.f32.mrf.mxu0
        %v1311 = vadd.f32 %v1218, %v1310
        %1312 = vmatprep.mubr.bf16.mxu0 %v883
        %1313 = vmatmul.mubr.bf16.gmra.mxu0 %v882
        %v1314 = vpop.f32.mrf.mxu0
        %v1315 = vadd.f32 %v1222, %v1314
        %v1316 = vpop.f32.mrf.mxu0
        %v1317 = vadd.f32 %v1224, %v1316
        %v1318 = vpop.f32.mrf.mxu0
        %v1319 = vadd.f32 %v1226, %v1318
        %v1320 = vpop.f32.mrf.mxu0
        %v1321 = vadd.f32 %v1228, %v1320
        %1322 = vmatprep.mubr.bf16.mxu0 %v892
        %1323 = vmatmul.mubr.bf16.gmra.mxu0 %v891
        %v1324 = vpop.f32.mrf.mxu0
        %v1325 = vadd.f32 %v1232, %v1324
        %v1326 = vpop.f32.mrf.mxu0
        %v1327 = vadd.f32 %v1234, %v1326
        %v1328 = vpop.f32.mrf.mxu0
        %v1329 = vadd.f32 %v1236, %v1328
        %v1330 = vpop.f32.mrf.mxu0
        %v1331 = vadd.f32 %v1238, %v1330
        %1332 = vdwg.mxu0
        %1333 = vmatprep.subr.bf16.mxu0 0
        %1334 = vmatpush1.bf16.msra.mxu0 0
        %1335 = vmatprep.subr.bf16.mxu0 0
        %1336 = vmatpush1.bf16.msra.mxu0 0
        %1337 = vmatprep.subr.bf16.mxu0 0
        %1338 = vmatpush1.bf16.msra.mxu0 0
        %1339 = vmatprep.subr.bf16.mxu0 %v611
        %1340 = vmatpush1.bf16.msra.mxu0 %v610
        %1341 = vmatprep.subr.bf16.mxu0 %v609
        %1342 = vmatpush1.bf16.msra.mxu0 %v608
        %1343 = vmatprep.subr.bf16.mxu0 %v607
        %1344 = vmatpush1.bf16.msra.mxu0 %v606
        %1345 = vmatprep.subr.bf16.mxu0 %v605
        %1346 = vmatpush1.bf16.msra.mxu0 %v604
        %1347 = vmatprep.subr.bf16.mxu0 %v603
        %1348 = vmatpush1.bf16.msra.mxu0 %v602
        %1349 = vmatprep.subr.bf16.mxu0 0
        %1350 = vmatpush2.bf16.msra.mxu0 0
        %1351 = vmatprep.subr.bf16.mxu0 0
        %1352 = vmatpush2.bf16.msra.mxu0 0
        %1353 = vmatprep.subr.bf16.mxu0 0
        %1354 = vmatpush2.bf16.msra.mxu0 0
        %1355 = vmatprep.subr.bf16.mxu0 0
        %1356 = vmatpush2.bf16.msra.mxu0 0
        %1357 = vmatprep.subr.bf16.mxu0 0
        %1358 = vmatpush2.bf16.msra.mxu0 0
        %1359 = vmatprep.subr.bf16.mxu0 0
        %1360 = vmatpush2.bf16.msra.mxu0 0
        %1361 = vmatprep.subr.bf16.mxu0 0
        %1362 = vmatpush2.bf16.msra.mxu0 0
        %1363 = vmatprep.subr.bf16.mxu0 0
        %1364 = vmatpush2.bf16.msra.mxu0 0
        %1365 = vmatprep.mubr.bf16.mxu0 0
        %1366 = vmatmul.mubr.bf16.gmra.mxu0 %v944
        %v1367 = vpop.f32.mrf.mxu0
        %v1368 = vadd.f32 %v1275, %v1367
        %v1369 = vpop.f32.mrf.mxu0
        %v1370 = vadd.f32 %v1277, %v1369
        %v1371 = vpop.f32.mrf.mxu0
        %v1372 = vadd.f32 %v1279, %v1371
        %v1373 = vpop.f32.mrf.mxu0
        %v1374 = vadd.f32 %v1281, %v1373
        %1375 = vmatprep.mubr.bf16.mxu0 0
        %1376 = vmatmul.mubr.bf16.gmra.mxu0 %v947
        %v1377 = vpop.f32.mrf.mxu0
        %v1378 = vadd.f32 %v1285, %v1377
        %v1379 = vpop.f32.mrf.mxu0
        %v1380 = vadd.f32 %v1287, %v1379
        %v1381 = vpop.f32.mrf.mxu0
        %v1382 = vadd.f32 %v1289, %v1381
        %v1383 = vpop.f32.mrf.mxu0
        %v1384 = vadd.f32 %v1291, %v1383
        %1385 = vmatprep.mubr.bf16.mxu0 0
        %1386 = vmatmul.mubr.bf16.gmra.mxu0 %v950
        %v1387 = vpop.f32.mrf.mxu0
        %v1388 = vadd.f32 %v1295, %v1387
        %v1389 = vpop.f32.mrf.mxu0
        %v1390 = vadd.f32 %v1297, %v1389
        %v1391 = vpop.f32.mrf.mxu0
        %v1392 = vadd.f32 %v1299, %v1391
        %v1393 = vpop.f32.mrf.mxu0
        %v1394 = vadd.f32 %v1301, %v1393
        %1395 = vmatprep.mubr.bf16.mxu0 0
        %1396 = vmatmul.mubr.bf16.gmra.mxu0 %v953
        %v1397 = vpop.f32.mrf.mxu0
        %v1398 = vadd.f32 %v1305, %v1397
        %v1399 = vpop.f32.mrf.mxu0
        %v1400 = vadd.f32 %v1307, %v1399
        %v1401 = vpop.f32.mrf.mxu0
        %v1402 = vadd.f32 %v1309, %v1401
        %v1403 = vpop.f32.mrf.mxu0
        %v1404 = vadd.f32 %v1311, %v1403
        %1405 = vmatprep.mubr.bf16.mxu0 0
        %1406 = vmatmul.mubr.bf16.gmra.mxu0 %v956
        %v1407 = vpop.f32.mrf.mxu0
        %v1408 = vadd.f32 %v1315, %v1407
        %v1409 = vpop.f32.mrf.mxu0
        %v1410 = vadd.f32 %v1317, %v1409
        %v1411 = vpop.f32.mrf.mxu0
        %v1412 = vadd.f32 %v1319, %v1411
        %v1413 = vpop.f32.mrf.mxu0
        %v1414 = vadd.f32 %v1321, %v1413
        %1415 = vmatprep.mubr.bf16.mxu0 0
        %1416 = vmatmul.mubr.bf16.gmra.mxu0 %v959
        %v1417 = vpop.f32.mrf.mxu0
        %v1418 = vadd.f32 %v1325, %v1417
        %v1419 = vpop.f32.mrf.mxu0
        %v1420 = vadd.f32 %v1327, %v1419
        %v1421 = vpop.f32.mrf.mxu0
        %v1422 = vadd.f32 %v1329, %v1421
        %v1423 = vpop.f32.mrf.mxu0
        %v1424 = vadd.f32 %v1331, %v1423
        %1425 = vdwg.mxu0
        %vm1426 = vcmask 556032
        %v1427 = vsel %vm1426, %v1370, 0.0
        %v1428 = vadd.f32 %v1368, %v1427
        %1429 = vadd.xlane.f32.xlu0 %v1428
        %v1430 = vpop.xlane.xlu0 %1429
        %v1431 = vsel %vm1426, %v1374, 0.0
        %v1432 = vadd.f32 %v1372, %v1431
        %1433 = vadd.xlane.f32.xlu0 %v1432
        %v1434 = vpop.xlane.xlu0 %1433
        %v1435 = vsel %vm1426, %v1380, 0.0
        %v1436 = vadd.f32 %v1378, %v1435
        %1437 = vadd.xlane.f32.xlu0 %v1436
        %v1438 = vpop.xlane.xlu0 %1437
        %v1439 = vsel %vm1426, %v1384, 0.0
        %v1440 = vadd.f32 %v1382, %v1439
        %1441 = vadd.xlane.f32.xlu0 %v1440
        %v1442 = vpop.xlane.xlu0 %1441
        %v1443 = vsel %vm1426, %v1390, 0.0
        %v1444 = vadd.f32 %v1388, %v1443
        %1445 = vadd.xlane.f32.xlu0 %v1444
        %v1446 = vpop.xlane.xlu0 %1445
        %v1447 = vsel %vm1426, %v1394, 0.0
        %v1448 = vadd.f32 %v1392, %v1447
        %1449 = vadd.xlane.f32.xlu0 %v1448
        %v1450 = vpop.xlane.xlu0 %1449
        %v1451 = vsel %vm1426, %v1400, 0.0
        %v1452 = vadd.f32 %v1398, %v1451
        %1453 = vadd.xlane.f32.xlu0 %v1452
        %v1454 = vpop.xlane.xlu0 %1453
        %v1455 = vsel %vm1426, %v1404, 0.0
        %v1456 = vadd.f32 %v1402, %v1455
        %1457 = vadd.xlane.f32.xlu0 %v1456
        %v1458 = vpop.xlane.xlu0 %1457
        %v1459 = vsel %vm1426, %v1410, 0.0
        %v1460 = vadd.f32 %v1408, %v1459
        %1461 = vadd.xlane.f32.xlu0 %v1460
        %v1462 = vpop.xlane.xlu0 %1461
        %v1463 = vsel %vm1426, %v1414, 0.0
        %v1464 = vadd.f32 %v1412, %v1463
        %1465 = vadd.xlane.f32.xlu0 %v1464
        %v1466 = vpop.xlane.xlu0 %1465
        %v1467 = vsel %vm1426, %v1420, 0.0
        %v1468 = vadd.f32 %v1418, %v1467
        %1469 = vadd.xlane.f32.xlu0 %v1468
        %v1470 = vpop.xlane.xlu0 %1469
        %v1471 = vsel %vm1426, %v1424, 0.0
        %v1472 = vadd.f32 %v1422, %v1471
        %1473 = vadd.xlane.f32.xlu0 %v1472
        %v1474 = vpop.xlane.xlu0 %1473
        %v1475 = vmul.f32 %v1430, 0.0051020407
        %v1476 = vmul.f32 %v1434, 0.0051020407
        %v1477 = vmul.f32 %v1438, 0.0051020407
        %v1478 = vmul.f32 %v1442, 0.0051020407
        %v1479 = vmul.f32 %v1446, 0.0051020407
        %v1480 = vmul.f32 %v1450, 0.0051020407
        %v1481 = vmul.f32 %v1454, 0.0051020407
        %v1482 = vmul.f32 %v1458, 0.0051020407
        %v1483 = vmul.f32 %v1462, 0.0051020407
        %v1484 = vmul.f32 %v1466, 0.0051020407
        %v1485 = vmul.f32 %v1470, 0.0051020407
        %v1486 = vmul.f32 %v1474, 0.0051020407
        %v1487 = vsub.f32 %v1368, %v1475
        %v1488 = vsub.f32 %v1370, %v1475
        %v1489 = vsub.f32 %v1372, %v1476
        %v1490 = vsub.f32 %v1374, %v1476
        %v1491 = vsub.f32 %v1378, %v1477
        %v1492 = vsub.f32 %v1380, %v1477
        %v1493 = vsub.f32 %v1382, %v1478
        %v1494 = vsub.f32 %v1384, %v1478
        %v1495 = vsub.f32 %v1388, %v1479
        %v1496 = vsub.f32 %v1390, %v1479
        %v1497 = vsub.f32 %v1392, %v1480
        %v1498 = vsub.f32 %v1394, %v1480
        %v1499 = vsub.f32 %v1398, %v1481
        %v1500 = vsub.f32 %v1400, %v1481
        %v1501 = vsub.f32 %v1402, %v1482
        %v1502 = vsub.f32 %v1404, %v1482
        %v1503 = vsub.f32 %v1408, %v1483
        %v1504 = vsub.f32 %v1410, %v1483
        %v1505 = vsub.f32 %v1412, %v1484
        %v1506 = vsub.f32 %v1414, %v1484
        %v1507 = vsub.f32 %v1418, %v1485
        %v1508 = vsub.f32 %v1420, %v1485
        %v1509 = vsub.f32 %v1422, %v1486
        %v1510 = vsub.f32 %v1424, %v1486
        %v1511 = vmul.f32 %v1487, %v1487
        %v1512 = vmul.f32 %v1488, %v1488
        %v1513 = vmul.f32 %v1489, %v1489
        %v1514 = vmul.f32 %v1490, %v1490
        %v1515 = vmul.f32 %v1491, %v1491
        %v1516 = vmul.f32 %v1492, %v1492
        %v1517 = vmul.f32 %v1493, %v1493
        %v1518 = vmul.f32 %v1494, %v1494
        %v1519 = vmul.f32 %v1495, %v1495
        %v1520 = vmul.f32 %v1496, %v1496
        %v1521 = vmul.f32 %v1497, %v1497
        %v1522 = vmul.f32 %v1498, %v1498
        %v1523 = vmul.f32 %v1499, %v1499
        %v1524 = vmul.f32 %v1500, %v1500
        %v1525 = vmul.f32 %v1501, %v1501
        %v1526 = vmul.f32 %v1502, %v1502
        %v1527 = vmul.f32 %v1503, %v1503
        %v1528 = vmul.f32 %v1504, %v1504
        %v1529 = vmul.f32 %v1505, %v1505
        %v1530 = vmul.f32 %v1506, %v1506
        %v1531 = vmul.f32 %v1507, %v1507
        %v1532 = vmul.f32 %v1508, %v1508
        %v1533 = vmul.f32 %v1509, %v1509
        %v1534 = vmul.f32 %v1510, %v1510
        %v1535 = vsel %vm1426, %v1512, 0.0
        %v1536 = vadd.f32 %v1511, %v1535
        %1537 = vadd.xlane.f32.xlu0 %v1536
        %v1538 = vpop.xlane.xlu0 %1537
        %v1539 = vsel %vm1426, %v1514, 0.0
        %v1540 = vadd.f32 %v1513, %v1539
        %1541 = vadd.xlane.f32.xlu0 %v1540
        %v1542 = vpop.xlane.xlu0 %1541
        %v1543 = vsel %vm1426, %v1516, 0.0
        %v1544 = vadd.f32 %v1515, %v1543
        %1545 = vadd.xlane.f32.xlu0 %v1544
        %v1546 = vpop.xlane.xlu0 %1545
        %v1547 = vsel %vm1426, %v1518, 0.0
        %v1548 = vadd.f32 %v1517, %v1547
        %1549 = vadd.xlane.f32.xlu0 %v1548
        %v1550 = vpop.xlane.xlu0 %1549
        %v1551 = vsel %vm1426, %v1520, 0.0
        %v1552 = vadd.f32 %v1519, %v1551
        %1553 = vadd.xlane.f32.xlu0 %v1552
        %v1554 = vpop.xlane.xlu0 %1553
        %v1555 = vsel %vm1426, %v1522, 0.0
        %v1556 = vadd.f32 %v1521, %v1555
        %1557 = vadd.xlane.f32.xlu0 %v1556
        %v1558 = vpop.xlane.xlu0 %1557
        %v1559 = vsel %vm1426, %v1524, 0.0
        %v1560 = vadd.f32 %v1523, %v1559
        %1561 = vadd.xlane.f32.xlu0 %v1560
        %v1562 = vpop.xlane.xlu0 %1561
        %v1563 = vsel %vm1426, %v1526, 0.0
        %v1564 = vadd.f32 %v1525, %v1563
        %1565 = vadd.xlane.f32.xlu0 %v1564
        %v1566 = vpop.xlane.xlu0 %1565
        %v1567 = vsel %vm1426, %v1528, 0.0
        %v1568 = vadd.f32 %v1527, %v1567
        %1569 = vadd.xlane.f32.xlu0 %v1568
        %v1570 = vpop.xlane.xlu0 %1569
        %v1571 = vsel %vm1426, %v1530, 0.0
        %v1572 = vadd.f32 %v1529, %v1571
        %1573 = vadd.xlane.f32.xlu0 %v1572
        %v1574 = vpop.xlane.xlu0 %1573
        %v1575 = vsel %vm1426, %v1532, 0.0
        %v1576 = vadd.f32 %v1531, %v1575
        %1577 = vadd.xlane.f32.xlu0 %v1576
        %v1578 = vpop.xlane.xlu0 %1577
        %v1579 = vsel %vm1426, %v1534, 0.0
        %v1580 = vadd.f32 %v1533, %v1579
        %1581 = vadd.xlane.f32.xlu0 %v1580
        %v1582 = vpop.xlane.xlu0 %1581
        %v1583 = vmul.f32 %v1538, 0.0051020407
        %v1584 = vmul.f32 %v1542, 0.0051020407
        %v1585 = vmul.f32 %v1546, 0.0051020407
        %v1586 = vmul.f32 %v1550, 0.0051020407
        %v1587 = vmul.f32 %v1554, 0.0051020407
        %v1588 = vmul.f32 %v1558, 0.0051020407
        %v1589 = vmul.f32 %v1562, 0.0051020407
        %v1590 = vmul.f32 %v1566, 0.0051020407
        %v1591 = vmul.f32 %v1570, 0.0051020407
        %v1592 = vmul.f32 %v1574, 0.0051020407
        %v1593 = vmul.f32 %v1578, 0.0051020407
        %v1594 = vmul.f32 %v1582, 0.0051020407
        %v1595 = vadd.f32 %v1583, 1e-05
        %v1596 = vadd.f32 %v1584, 1e-05
        %v1597 = vadd.f32 %v1585, 1e-05
        %v1598 = vadd.f32 %v1586, 1e-05
        %v1599 = vadd.f32 %v1587, 1e-05
        %v1600 = vadd.f32 %v1588, 1e-05
        %v1601 = vadd.f32 %v1589, 1e-05
        %v1602 = vadd.f32 %v1590, 1e-05
        %v1603 = vadd.f32 %v1591, 1e-05
        %v1604 = vadd.f32 %v1592, 1e-05
        %v1605 = vadd.f32 %v1593, 1e-05
        %v1606 = vadd.f32 %v1594, 1e-05
        %v1607 = vrsqrt.pop %v1595
        %v1608 = vrsqrt.pop %v1596
        %v1609 = vrsqrt.pop %v1597
        %v1610 = vrsqrt.pop %v1598
        %v1611 = vrsqrt.pop %v1599
        %v1612 = vrsqrt.pop %v1600
        %v1613 = vrsqrt.pop %v1601
        %v1614 = vrsqrt.pop %v1602
        %v1615 = vrsqrt.pop %v1603
        %v1616 = vrsqrt.pop %v1604
        %v1617 = vrsqrt.pop %v1605
        %v1618 = vrsqrt.pop %v1606
        %v1619 = vld [vmem:[%s194] sm:$0xff]
        %v1620 = vld [vmem:[%s194 + $0x8] sm:$0xff]
        %v1621 = vld [vmem:[%s194 + $0x10] sm:$0xff]
        %v1622 = vld [vmem:[%s194 + $0x18] sm:$0xff]
        %v1623 = vld [vmem:[%s194 + $0x20] sm:$0xff]
        %v1624 = vld [vmem:[%s194 + $0x28] sm:$0xff]
        %v1625 = vld [vmem:[%s194 + $0x30] sm:$0xff]
        %v1626 = vld [vmem:[%s194 + $0x38] sm:$0xff]
        %v1627 = vld [vmem:[%s194 + $0x40] sm:$0xff]
        %v1628 = vld [vmem:[%s194 + $0x48] sm:$0xff]
        %v1629 = vld [vmem:[%s194 + $0x50] sm:$0xff]
        %v1630 = vld [vmem:[%s194 + $0x58] sm:$0xff]
        %v1631 = vmul.f32 %v1619, %v1607
        %v1632 = vmul.f32 %v1620, %v1608
        %v1633 = vmul.f32 %v1621, %v1609
        %v1634 = vmul.f32 %v1622, %v1610
        %v1635 = vmul.f32 %v1623, %v1611
        %v1636 = vmul.f32 %v1624, %v1612
        %v1637 = vmul.f32 %v1625, %v1613
        %v1638 = vmul.f32 %v1626, %v1614
        %v1639 = vmul.f32 %v1627, %v1615
        %v1640 = vmul.f32 %v1628, %v1616
        %v1641 = vmul.f32 %v1629, %v1617
        %v1642 = vmul.f32 %v1630, %v1618
        %1644 = vset.pattern.permute.xlu0 0
        %1645 = vperm.xlu0 %1644, %v1631
        %v1646 = vpop.permute.xlu0 %1645
        %1649 = vset.pattern.permute.xlu0 0
        %1650 = vperm.xlu0 %1649, %v1632
        %v1651 = vpop.permute.xlu0 %1650
        %1654 = vset.pattern.permute.xlu0 0
        %1655 = vperm.xlu0 %1654, %v1633
        %v1656 = vpop.permute.xlu0 %1655
        %1659 = vset.pattern.permute.xlu0 0
        %1660 = vperm.xlu0 %1659, %v1634
        %v1661 = vpop.permute.xlu0 %1660
        %1664 = vset.pattern.permute.xlu0 0
        %1665 = vperm.xlu0 %1664, %v1635
        %v1666 = vpop.permute.xlu0 %1665
        %1669 = vset.pattern.permute.xlu0 0
        %1670 = vperm.xlu0 %1669, %v1636
        %v1671 = vpop.permute.xlu0 %1670
        %1674 = vset.pattern.permute.xlu0 0
        %1675 = vperm.xlu0 %1674, %v1637
        %v1676 = vpop.permute.xlu0 %1675
        %1679 = vset.pattern.permute.xlu0 0
        %1680 = vperm.xlu0 %1679, %v1638
        %v1681 = vpop.permute.xlu0 %1680
        %1684 = vset.pattern.permute.xlu0 0
        %1685 = vperm.xlu0 %1684, %v1639
        %v1686 = vpop.permute.xlu0 %1685
        %1689 = vset.pattern.permute.xlu0 0
        %1690 = vperm.xlu0 %1689, %v1640
        %v1691 = vpop.permute.xlu0 %1690
        %1694 = vset.pattern.permute.xlu0 0
        %1695 = vperm.xlu0 %1694, %v1641
        %v1696 = vpop.permute.xlu0 %1695
        %1699 = vset.pattern.permute.xlu0 0
        %1700 = vperm.xlu0 %1699, %v1642
        %v1701 = vpop.permute.xlu0 %1700
        %v1703 = vmul.f32 %v1487, %v1646
        %v1704 = vmul.f32 %v1488, %v1646
        %v1705 = vmul.f32 %v1489, %v1651
        %v1706 = vmul.f32 %v1490, %v1651
        %v1707 = vmul.f32 %v1491, %v1656
        %v1708 = vmul.f32 %v1492, %v1656
        %v1709 = vmul.f32 %v1493, %v1661
        %v1710 = vmul.f32 %v1494, %v1661
        %v1711 = vmul.f32 %v1495, %v1666
        %v1712 = vmul.f32 %v1496, %v1666
        %v1713 = vmul.f32 %v1497, %v1671
        %v1714 = vmul.f32 %v1498, %v1671
        %v1715 = vmul.f32 %v1499, %v1676
        %v1716 = vmul.f32 %v1500, %v1676
        %v1717 = vmul.f32 %v1501, %v1681
        %v1718 = vmul.f32 %v1502, %v1681
        %v1719 = vmul.f32 %v1503, %v1686
        %v1720 = vmul.f32 %v1504, %v1686
        %v1721 = vmul.f32 %v1505, %v1691
        %v1722 = vmul.f32 %v1506, %v1691
        %v1723 = vmul.f32 %v1507, %v1696
        %v1724 = vmul.f32 %v1508, %v1696
        %v1725 = vmul.f32 %v1509, %v1701
        %v1726 = vmul.f32 %v1510, %v1701
        %1728 = vset.pattern.permute.xlu0 1
        %1729 = vperm.xlu0 %1728, %v1619
        %v1730 = vpop.permute.xlu0 %1729
        %1733 = vset.pattern.permute.xlu0 1
        %1734 = vperm.xlu0 %1733, %v1620
        %v1735 = vpop.permute.xlu0 %1734
        %1738 = vset.pattern.permute.xlu0 1
        %1739 = vperm.xlu0 %1738, %v1621
        %v1740 = vpop.permute.xlu0 %1739
        %1743 = vset.pattern.permute.xlu0 1
        %1744 = vperm.xlu0 %1743, %v1622
        %v1745 = vpop.permute.xlu0 %1744
        %1748 = vset.pattern.permute.xlu0 1
        %1749 = vperm.xlu0 %1748, %v1623
        %v1750 = vpop.permute.xlu0 %1749
        %1753 = vset.pattern.permute.xlu0 1
        %1754 = vperm.xlu0 %1753, %v1624
        %v1755 = vpop.permute.xlu0 %1754
        %1758 = vset.pattern.permute.xlu0 1
        %1759 = vperm.xlu0 %1758, %v1625
        %v1760 = vpop.permute.xlu0 %1759
        %1763 = vset.pattern.permute.xlu0 1
        %1764 = vperm.xlu0 %1763, %v1626
        %v1765 = vpop.permute.xlu0 %1764
        %1768 = vset.pattern.permute.xlu0 1
        %1769 = vperm.xlu0 %1768, %v1627
        %v1770 = vpop.permute.xlu0 %1769
        %1773 = vset.pattern.permute.xlu0 1
        %1774 = vperm.xlu0 %1773, %v1628
        %v1775 = vpop.permute.xlu0 %1774
        %1778 = vset.pattern.permute.xlu0 1
        %1779 = vperm.xlu0 %1778, %v1629
        %v1780 = vpop.permute.xlu0 %1779
        %1783 = vset.pattern.permute.xlu0 1
        %1784 = vperm.xlu0 %1783, %v1630
        %v1785 = vpop.permute.xlu0 %1784
        %v1787 = vadd.f32 %v1703, %v1730
        %v1788 = vadd.f32 %v1704, %v1730
        %v1789 = vadd.f32 %v1705, %v1735
        %v1790 = vadd.f32 %v1706, %v1735
        %v1791 = vadd.f32 %v1707, %v1740
        %v1792 = vadd.f32 %v1708, %v1740
        %v1793 = vadd.f32 %v1709, %v1745
        %v1794 = vadd.f32 %v1710, %v1745
        %v1795 = vadd.f32 %v1711, %v1750
        %v1796 = vadd.f32 %v1712, %v1750
        %v1797 = vadd.f32 %v1713, %v1755
        %v1798 = vadd.f32 %v1714, %v1755
        %v1799 = vadd.f32 %v1715, %v1760
        %v1800 = vadd.f32 %v1716, %v1760
        %v1801 = vadd.f32 %v1717, %v1765
        %v1802 = vadd.f32 %v1718, %v1765
        %v1803 = vadd.f32 %v1719, %v1770
        %v1804 = vadd.f32 %v1720, %v1770
        %v1805 = vadd.f32 %v1721, %v1775
        %v1806 = vadd.f32 %v1722, %v1775
        %v1807 = vadd.f32 %v1723, %v1780
        %v1808 = vadd.f32 %v1724, %v1780
        %v1809 = vadd.f32 %v1725, %v1785
        %v1810 = vadd.f32 %v1726, %v1785
        %1811 = vst [vmem:[%s182] sm:$0xff] %v1787
        %1812 = vst.msk [vmem:[%s182 + $0x8] sm:$0xff] %vm1426, %v1788
        %1813 = vst [vmem:[%s182 + $0x10] sm:$0xff] %v1789
        %1814 = vst.msk [vmem:[%s182 + $0x18] sm:$0xff] %vm1426, %v1790
        %1815 = vst [vmem:[%s182 + $0x20] sm:$0xff] %v1791
        %1816 = vst.msk [vmem:[%s182 + $0x28] sm:$0xff] %vm1426, %v1792
        %1817 = vst [vmem:[%s182 + $0x30] sm:$0xff] %v1793
        %1818 = vst.msk [vmem:[%s182 + $0x38] sm:$0xff] %vm1426, %v1794
        %1819 = vst [vmem:[%s182 + $0x40] sm:$0xff] %v1795
        %1820 = vst.msk [vmem:[%s182 + $0x48] sm:$0xff] %vm1426, %v1796
        %1821 = vst [vmem:[%s182 + $0x50] sm:$0xff] %v1797
        %1822 = vst.msk [vmem:[%s182 + $0x58] sm:$0xff] %vm1426, %v1798
        %1823 = vst [vmem:[%s182 + $0x60] sm:$0xff] %v1799
        %1824 = vst.msk [vmem:[%s182 + $0x68] sm:$0xff] %vm1426, %v1800
        %1825 = vst [vmem:[%s182 + $0x70] sm:$0xff] %v1801
        %1826 = vst.msk [vmem:[%s182 + $0x78] sm:$0xff] %vm1426, %v1802
        %1827 = vst [vmem:[%s182 + $0x80] sm:$0xff] %v1803
        %1828 = vst.msk [vmem:[%s182 + $0x88] sm:$0xff] %vm1426, %v1804
        %1829 = vst [vmem:[%s182 + $0x90] sm:$0xff] %v1805
        %1830 = vst.msk [vmem:[%s182 + $0x98] sm:$0xff] %vm1426, %v1806
        %1831 = vst [vmem:[%s182 + $0xa0] sm:$0xff] %v1807
        %1832 = vst.msk [vmem:[%s182 + $0xa8] sm:$0xff] %vm1426, %v1808
        %1833 = vst [vmem:[%s182 + $0xb0] sm:$0xff] %v1809
        %1834 = vst.msk [vmem:[%s182 + $0xb8] sm:$0xff] %vm1426, %v1810
        %s1835 = sand.u32 %s98, 1
        %s1836 = scalar_lea.sflag [#allocation3], %s1835
        %s1837 = sand.u32 %s98, 1
        %s1838 = smul.addr %s1837, 192
        %s1839 = scalar_lea.vmem [#allocation2], %s1838
        // Predicated region
        $region33: #{tpu_custom_call.1} parent=31 // pred_check
          %p1840 = pneg %p108
        $region34: #{tpu_custom_call.1} parent=31 // pred_check_branch
          %1842 = sbr.rel (%p1840) target = $region36
        $region35: #{tpu_custom_call.1} parent=31 // pred_region
          %s1843 = smul.u32 12, %s17
          %s1845 = ssub.s32 3072, 3072
          %1846 = vsyncadd %s1836, %s1845
          %s1847 = smul.addr %s1843, 2
          %s1848 = smul.addr %s1847, 128
          %s1849 = scalar_lea.hbm %s3, %s1848
          %s1850 = sshll.u32 %s1839, 4
          %s1851 = int_to_ptr.vmem [resolvable:$true] %s1850
          %1856 = dma.vmem_to_hbm [thread:$0]  %s1851, 3072, %s1849, %s1836, 256, 256, 16
        $region36: #{tpu_custom_call.1} parent=31 // pred_fallthru
          _
      $region32: #{tpu_custom_call.1} parent=5 // pred_fallthru
        _
      %p1857 = scmp.le.s32.totalorder 2, %s12
      // Predicated region
      $region37: #{tpu_custom_call.1} parent=5 // pred_check
        %p1858 = pneg %p1857
      $region38: #{tpu_custom_call.1} parent=5 // pred_check_branch
        %1860 = sbr.rel (%p1858) target = $region40
      $region39: #{tpu_custom_call.1} parent=5 // pred_region
        %s1861 = ssub.s32 %s12, 2
        // Predicated region
        $region41: #{tpu_custom_call.1} parent=39 // pred_check
          %p1862 = pneg %p114
        $region42: #{tpu_custom_call.1} parent=39 // pred_check_branch
          %1864 = sbr.rel (%p1862) target = $region44
        $region43: #{tpu_custom_call.1} parent=39 // pred_region
          %s1865 = sand.u32 %s99, 1
          %s1866 = scalar_lea.sflag [#allocation3], %s1865
          %s1867 = sand.u32 %s99, 1
          %s1868 = smul.addr %s1867, 192
          %s1869 = scalar_lea.vmem [#allocation2], %s1868
          %1870 = dma.done %s1866, 3072
        $region44: #{tpu_custom_call.1} parent=39 // pred_fallthru
          _
      $region40: #{tpu_custom_call.1} parent=5 // pred_fallthru
        _
    $region6: #{tpu_custom_call.1} parent=1 // loop_footer
      %s16 = sadd.s32 1, %s12
    $region7: #{tpu_custom_call.1} parent=1 // loop_footer_branch
      %11 = sbr.rel target = $region3
    $region8: #{tpu_custom_call.1} parent=1 // loop_exit
      _
    %1871 = vsyncpa [#allocation3], 1
    %s1872 = scalar_lea.sflag [#allocation3], 1
    %1873 = vsyncpa %s1872, 1

</llo_original>
